<compile_context>
chip_gen: v6e
topology: v6e:2x2x1
jax: 0.10.0
libtpu: 0.0.40
codegen_flags: <defaults>
</compile_context>

<pallas_src>
import functools

import jax
import jax.numpy as jnp
from jax.experimental import pallas as pl
from jax.experimental.pallas import tpu as pltpu


# ----------------------------------------------------------------------------
# Fused kernel: the entire FastConv forward for the whole (tiny) batch.
# Single program (no grid): cross-batch BatchNorm statistics serialize the
# pipeline, and at these shapes everything (a few KB) lives in VMEM.
# TODO(synk): for v7x's two TensorCores one could split N across cores with a
# cross-core BN-stats exchange (CMEM/semaphores); not worth it at N=2.
# ----------------------------------------------------------------------------
def _fused_fastconv_kernel(
    xf_ref, xs_ref,
    w1_ref, b1_ref, g1_ref, bt1_ref,
    w2_ref, b2_ref, g2_ref, bt2_ref,
    ws_ref, bs_ref, wh_ref, bh_ref,
    feat_ref, logit_ref,
    xfpad, z1pad, y1s, y2s, im1, im2,
    *, K, eps,
):
    N, Tf, Cf = xf_ref.shape
    half = b1_ref.shape[1]
    hidden = 2 * half
    nch = bh_ref.shape[1]                  # packed head width = 3 * num_classes
    T2, T4 = Tf // 2, Tf // 4
    PAD = (K - 1) // 2
    Lp1, Lp2 = Tf + K - 1, T2 + K - 1      # padded per-batch slab lengths

    def mxu(a, b):
        # bf16 MXU operands, f32 accumulation (review items: bf16 matmuls,
        # f32 VPU epilogue).
        return jnp.dot(a.astype(jnp.bfloat16), b.astype(jnp.bfloat16),
                       preferred_element_type=jnp.float32)

    # ------------- stage 1: Conv1d(Cf -> half, K, padding='same') -----------
    xfpad[...] = jnp.zeros_like(xfpad)     # in-kernel zero halo (no jnp.pad)
    w1, b1 = w1_ref[...], b1_ref[...]
    for n in range(N):                     # static unroll, N is tiny
        xfpad[pl.ds(n * Lp1 + PAD, Tf), :] = xf_ref[n]
        for k in range(K):                 # build im2col view in VMEM scratch
            im1[:, k * Cf:(k + 1) * Cf] = xfpad[pl.ds(n * Lp1 + k, Tf), :]
        # one MXU matmul per batch element: (Tf, K*Cf) @ (K*Cf, half)
        y1s[pl.ds(n * Tf, Tf), :] = mxu(im1[...], w1) + b1

    # BatchNorm1d #1: training-mode batch stats over (N, T), in-kernel.
    y1 = y1s[...]                          # (N*Tf, half), VMEM resident
    m1 = jnp.mean(y1, axis=0, keepdims=True)
    v1 = jnp.mean((y1 - m1) ** 2, axis=0, keepdims=True)   # biased variance
    sc1 = g1_ref[...] * jax.lax.rsqrt(v1 + eps)
    sh1 = bt1_ref[...] - m1 * sc1

    # ---- fused BN + ReLU + MaxPool(2) epilogue, then stage-2 conv ----------
    z1pad[...] = jnp.zeros_like(z1pad)     # zero halo for the second conv
    w2, b2 = w2_ref[...], b2_ref[...]
    for n in range(N):
        ev = y1s[pl.ds(n * Tf, T2, 2), :]          # even time steps
        od = y1s[pl.ds(n * Tf + 1, T2, 2), :]      # odd time steps
        za = jnp.maximum(ev * sc1 + sh1, 0.0)
        zb = jnp.maximum(od * sc1 + sh1, 0.0)
        z1pad[pl.ds(n * Lp2 + PAD, T2), :] = jnp.maximum(za, zb)
        # stage 2: Conv1d(half -> half, K, padding='same') as one im2col matmul
        for k in range(K):
            im2[:, k * half:(k + 1) * half] = z1pad[pl.ds(n * Lp2 + k, T2), :]
        y2s[pl.ds(n * T2, T2), :] = mxu(im2[...], w2) + b2

    # BatchNorm1d #2 stats.
    y2 = y2s[...]
    m2 = jnp.mean(y2, axis=0, keepdims=True)
    v2 = jnp.mean((y2 - m2) ** 2, axis=0, keepdims=True)
    sc2 = g2_ref[...] * jax.lax.rsqrt(v2 + eps)
    sh2 = bt2_ref[...] - m2 * sc2

    # ---- BN+ReLU+Pool, slow 1x1 conv, channel concat, fused 3-head matmul --
    ws, bs = ws_ref[...], bs_ref[...]
    wh, bh = wh_ref[...], bh_ref[...]
    for n in range(N):
        ev = y2s[pl.ds(n * T2, T4, 2), :]
        od = y2s[pl.ds(n * T2 + 1, T4, 2), :]
        za = jnp.maximum(ev * sc2 + sh2, 0.0)
        zb = jnp.maximum(od * sc2 + sh2, 0.0)
        fast_n = jnp.maximum(za, zb)               # (T4, half)
        slow_n = mxu(xs_ref[n], ws) + bs           # (T4, half) slow 1x1 conv
        # Outputs are packed (T, N*C): column block n holds batch n's channels,
        # so the wrapper reshape to (T, N, C) is a free row-major reshape.
        feat_ref[:, n * hidden:n * hidden + half] = slow_n
        feat_ref[:, n * hidden + half:(n + 1) * hidden] = fast_n
        feat_n = feat_ref[:, n * hidden:(n + 1) * hidden]    # (T4, hidden)
        # fc + fc_intra[0] + fc_intra[1] fused into one (hidden, 3*nc) matmul.
        logit_ref[:, n * nch:(n + 1) * nch] = mxu(feat_n, wh) + bh


# ----------------------------------------------------------------------------
# Parameter packing (PyTorch conventions -> kernel layouts).  Tiny one-off jnp
# ops on parameters, fused under jit.
# ----------------------------------------------------------------------------
def _prep_params(p, K):
    half = p["b_f1"].shape[0]
    nc = p["b_fc"].shape[0]
    fast_in = p["w_f1"].shape[1]

    # Conv1d weight (Cout, Cin, K) -> im2col weight (K*Cin, Cout), row = k*Cin+ci
    w1 = jnp.transpose(p["w_f1"], (2, 1, 0)).reshape(K * fast_in, half)
    w2 = jnp.transpose(p["w_f2"], (2, 1, 0)).reshape(K * half, half)
    ws = p["w_slow"][:, :, 0].T                      # (slow_in, half)

    zeros = jnp.zeros((half, nc), jnp.float32)
    wh = jnp.concatenate(
        [
            p["w_fc"].T,                                      # inter head
            jnp.concatenate([p["w_i0"].T, zeros], axis=0),    # slow-only head
            jnp.concatenate([zeros, p["w_i1"].T], axis=0),    # fast-only head
        ],
        axis=1,
    )                                                         # (hidden, 3*nc)
    bh = jnp.concatenate([p["b_fc"], p["b_i0"], p["b_i1"]]).reshape(1, 3 * nc)

    row = lambda v: v.reshape(1, -1)
    return (w1, row(p["b_f1"]), row(p["gamma1"]), row(p["beta1"]),
            w2, row(p["b_f2"]), row(p["gamma2"]), row(p["beta2"]),
            ws, row(p["b_slow"]), wh, bh)


# ----------------------------------------------------------------------------
# Forward wrapper (same outputs as FastConv.forward, training-mode BatchNorm).
# ----------------------------------------------------------------------------
@jax.jit
def fast_conv_forward(slow_path_ncl, fast_path_ncl, lgt, p):
    N, slow_in, Ts = slow_path_ncl.shape
    _, fast_in, Tf = fast_path_ncl.shape
    half = p["b_f1"].shape[0]
    hidden = 2 * half
    nc = p["b_fc"].shape[0]
    K = p["w_f1"].shape[2]
    assert Tf % 4 == 0 and Ts == Tf // 4, "fast path must be 4x the slow path"
    T2, T4 = Tf // 2, Tf // 4

    # NCL -> NLC entry transposes (~1 KB each); kept in the wrapper because an
    # in-kernel small-2D transpose buys nothing at these sizes.
    xf = jnp.transpose(fast_path_ncl, (0, 2, 1))     # (N, Tf, fast_in)
    xs = jnp.transpose(slow_path_ncl, (0, 2, 1))     # (N, T4, slow_in)

    (w1, b1, g1, bt1, w2, b2, g2, bt2, ws, bs, wh, bh) = _prep_params(p, K)

    kern = functools.partial(_fused_fastconv_kernel, K=K, eps=1e-5)
    vmem = pl.BlockSpec(memory_space=pltpu.MemorySpace.VMEM)

    feat_pk, logit_pk = pl.pallas_call(
        kern,
        out_shape=(
            jax.ShapeDtypeStruct((T4, N * hidden), jnp.float32),   # packed feats
            jax.ShapeDtypeStruct((T4, N * 3 * nc), jnp.float32),   # packed logits
        ),
        in_specs=[vmem] * 14,
        out_specs=(vmem, vmem),
        scratch_shapes=[
            pltpu.VMEM((N * (Tf + K - 1), fast_in), jnp.float32),  # padded fast in
            pltpu.VMEM((N * (T2 + K - 1), half), jnp.float32),     # padded pooled z1
            pltpu.VMEM((N * Tf, half), jnp.float32),               # conv1 output
            pltpu.VMEM((N * T2, half), jnp.float32),               # conv2 output
            pltpu.VMEM((Tf, K * fast_in), jnp.float32),            # im2col stage 1
            pltpu.VMEM((T2, K * half), jnp.float32),               # im2col stage 2
        ],
    )(xf, xs, w1, b1, g1, bt1, w2, b2, g2, bt2, ws, bs, wh, bh)

    # Free row-major reshapes: (T, N*C) -> (T, N, C) == PyTorch .permute(2,0,1).
    feat = feat_pk.reshape(T4, N, hidden)
    logits = logit_pk.reshape(T4, N, 3 * nc)

    return {
        "inter_feat": feat,
        "intra_feat": [feat[..., :half], feat[..., half:]],
        "conv_inter_logits": logits[..., :nc],
        "conv_intra_logits": [logits[..., nc:2 * nc], logits[..., 2 * nc:]],
        # floor(floor(x/2)/2) == floor(x/4) since both pools are k=s=2, no pad.
        "feat_len": lgt // 4,
    }


if __name__ == "__main__":
    N = 2
    fast_in, slow_in, hidden, num_classes = 4, 4, 32, 8
    half = hidden // 2
    T_fast, T_slow = 32, 8  # slow path is already downsampled 4x

    key = jax.random.PRNGKey(0)
    keys = jax.random.split(key, 16)

    def uinit(k, shape, fan_in):
        bound = 1.0 / jnp.sqrt(jnp.float32(fan_in))
        return jax.random.uniform(k, shape, jnp.float32, -bound, bound)

    params = {
        # PyTorch-convention parameter shapes
        "w_slow": uinit(keys[0], (half, slow_in, 1), slow_in * 1),
        "b_slow": uinit(keys[1], (half,), slow_in * 1),
        "w_f1": uinit(keys[2], (half, fast_in, 5), fast_in * 5),
        "b_f1": uinit(keys[3], (half,), fast_in * 5),
        "w_f2": uinit(keys[4], (half, half, 5), half * 5),
        "b_f2": uinit(keys[5], (half,), half * 5),
        "w_fc": uinit(keys[6], (num_classes, hidden), hidden),
        "b_fc": uinit(keys[7], (num_classes,), hidden),
        "w_i0": uinit(keys[8], (num_classes, half), half),
        "b_i0": uinit(keys[9], (num_classes,), half),
        "w_i1": uinit(keys[10], (num_classes, half), half),
        "b_i1": uinit(keys[11], (num_classes,), half),
        # BatchNorm1d default init (running-stat buffers not modeled; training-
        # mode batch statistics are used for normalization, matching forward()).
        "gamma1": jnp.ones((half,), jnp.float32),
        "beta1": jnp.zeros((half,), jnp.float32),
        "gamma2": jnp.ones((half,), jnp.float32),
        "beta2": jnp.zeros((half,), jnp.float32),
    }

    slow_path = jax.random.normal(keys[12], (N, slow_in, T_slow), jnp.float32)
    fast_path = jax.random.normal(keys[13], (N, fast_in, T_fast), jnp.float32)
    lgt = jnp.array([32, 28], jnp.int32)

    out = fast_conv_forward(slow_path, fast_path, lgt, params)
    jax.block_until_ready(out)

    assert out["inter_feat"].shape == (T_slow, N, hidden)
    assert out["conv_inter_logits"].shape == (T_slow, N, num_classes)
    assert out["intra_feat"][0].shape == (T_slow, N, half)
    assert out["intra_feat"][1].shape == (T_slow, N, half)
    assert out["conv_intra_logits"][0].shape == (T_slow, N, num_classes)
    assert out["conv_intra_logits"][1].shape == (T_slow, N, num_classes)
    assert out["feat_len"].shape == (N,)
    print("KERNEL_OK")
</pallas_src>

<mosaic_0001>
module attributes {stable_mosaic.version = 11 : i64} {
  func.func @_fused_fastconv_kernel(%arg0: memref<2x32x4xf32, #tpu.memory_space<vmem>>, %arg1: memref<2x8x4xf32, #tpu.memory_space<vmem>>, %arg2: memref<20x16xf32, #tpu.memory_space<vmem>>, %arg3: memref<1x16xf32, #tpu.memory_space<vmem>>, %arg4: memref<1x16xf32, #tpu.memory_space<vmem>>, %arg5: memref<1x16xf32, #tpu.memory_space<vmem>>, %arg6: memref<80x16xf32, #tpu.memory_space<vmem>>, %arg7: memref<1x16xf32, #tpu.memory_space<vmem>>, %arg8: memref<1x16xf32, #tpu.memory_space<vmem>>, %arg9: memref<1x16xf32, #tpu.memory_space<vmem>>, %arg10: memref<4x16xf32, #tpu.memory_space<vmem>>, %arg11: memref<1x16xf32, #tpu.memory_space<vmem>>, %arg12: memref<32x24xf32, #tpu.memory_space<vmem>>, %arg13: memref<1x24xf32, #tpu.memory_space<vmem>>, %arg14: memref<8x64xf32, #tpu.memory_space<vmem>>, %arg15: memref<8x48xf32, #tpu.memory_space<vmem>>, %arg16: memref<72x4xf32, #tpu.memory_space<vmem>>, %arg17: memref<40x16xf32, #tpu.memory_space<vmem>>, %arg18: memref<64x16xf32, #tpu.memory_space<vmem>>, %arg19: memref<32x16xf32, #tpu.memory_space<vmem>>, %arg20: memref<32x20xf32, #tpu.memory_space<vmem>>, %arg21: memref<16x80xf32, #tpu.memory_space<vmem>>) attributes {dimension_semantics = [], scalar_prefetch = 0 : i64, scratch_operands = 6 : i64, tpu.core_type = #tpu.core_type<tc>} {
    %cst = arith.constant 0.000000e+00 : f32
    %0 = vector.broadcast %cst : f32 to vector<72x4xf32>
    %c0 = arith.constant 0 : index
    %c0_0 = arith.constant 0 : index
    %1 = vector.load %arg16[%c0, %c0_0] : memref<72x4xf32, #tpu.memory_space<vmem>>, vector<72x4xf32>
    tpu.vector_store %arg16[%c0, %c0_0], %0 {strides = array<i32>} : memref<72x4xf32, #tpu.memory_space<vmem>>, vector<72x4xf32>,
    %c0_1 = arith.constant 0 : index
    %c0_2 = arith.constant 0 : index
    %2 = vector.load %arg2[%c0_1, %c0_2] : memref<20x16xf32, #tpu.memory_space<vmem>>, vector<20x16xf32>
    %c0_3 = arith.constant 0 : index
    %c0_4 = arith.constant 0 : index
    %3 = vector.load %arg3[%c0_3, %c0_4] : memref<1x16xf32, #tpu.memory_space<vmem>>, vector<1x16xf32>
    %c0_5 = arith.constant 0 : index
    %c0_6 = arith.constant 0 : index
    %c0_7 = arith.constant 0 : index
    %4 = vector.load %arg0[%c0_5, %c0_6, %c0_7] : memref<2x32x4xf32, #tpu.memory_space<vmem>>, vector<1x32x4xf32>
    %5 = vector.shape_cast %4 : vector<1x32x4xf32> to vector<32x4xf32>
    %c2 = arith.constant 2 : index
    %c0_8 = arith.constant 0 : index
    %6 = vector.load %arg16[%c2, %c0_8] : memref<72x4xf32, #tpu.memory_space<vmem>>, vector<32x4xf32>
    tpu.vector_store %arg16[%c2, %c0_8], %5 {strides = array<i32>} : memref<72x4xf32, #tpu.memory_space<vmem>>, vector<32x4xf32>,
    %c0_9 = arith.constant 0 : index
    %c0_10 = arith.constant 0 : index
    %7 = vector.load %arg16[%c0_9, %c0_10] : memref<72x4xf32, #tpu.memory_space<vmem>>, vector<32x4xf32>
    %c0_11 = arith.constant 0 : index
    %c0_12 = arith.constant 0 : index
    %8 = vector.load %arg20[%c0_11, %c0_12] : memref<32x20xf32, #tpu.memory_space<vmem>>, vector<32x4xf32>
    tpu.vector_store %arg20[%c0_11, %c0_12], %7 {strides = array<i32>} : memref<32x20xf32, #tpu.memory_space<vmem>>, vector<32x4xf32>,
    %c1 = arith.constant 1 : index
    %c0_13 = arith.constant 0 : index
    %9 = vector.load %arg16[%c1, %c0_13] : memref<72x4xf32, #tpu.memory_space<vmem>>, vector<32x4xf32>
    %c0_14 = arith.constant 0 : index
    %c4 = arith.constant 4 : index
    %10 = vector.load %arg20[%c0_14, %c4] : memref<32x20xf32, #tpu.memory_space<vmem>>, vector<32x4xf32>
    tpu.vector_store %arg20[%c0_14, %c4], %9 {strides = array<i32>} : memref<32x20xf32, #tpu.memory_space<vmem>>, vector<32x4xf32>,
    %c2_15 = arith.constant 2 : index
    %c0_16 = arith.constant 0 : index
    %11 = vector.load %arg16[%c2_15, %c0_16] : memref<72x4xf32, #tpu.memory_space<vmem>>, vector<32x4xf32>
    %c0_17 = arith.constant 0 : index
    %c8 = arith.constant 8 : index
    %12 = vector.load %arg20[%c0_17, %c8] : memref<32x20xf32, #tpu.memory_space<vmem>>, vector<32x4xf32>
    tpu.vector_store %arg20[%c0_17, %c8], %11 {strides = array<i32>} : memref<32x20xf32, #tpu.memory_space<vmem>>, vector<32x4xf32>,
    %c3 = arith.constant 3 : index
    %c0_18 = arith.constant 0 : index
    %13 = vector.load %arg16[%c3, %c0_18] : memref<72x4xf32, #tpu.memory_space<vmem>>, vector<32x4xf32>
    %c0_19 = arith.constant 0 : index
    %c12 = arith.constant 12 : index
    %14 = vector.load %arg20[%c0_19, %c12] : memref<32x20xf32, #tpu.memory_space<vmem>>, vector<32x4xf32>
    tpu.vector_store %arg20[%c0_19, %c12], %13 {strides = array<i32>} : memref<32x20xf32, #tpu.memory_space<vmem>>, vector<32x4xf32>,
    %c4_20 = arith.constant 4 : index
    %c0_21 = arith.constant 0 : index
    %15 = vector.load %arg16[%c4_20, %c0_21] : memref<72x4xf32, #tpu.memory_space<vmem>>, vector<32x4xf32>
    %c0_22 = arith.constant 0 : index
    %c16 = arith.constant 16 : index
    %16 = vector.load %arg20[%c0_22, %c16] : memref<32x20xf32, #tpu.memory_space<vmem>>, vector<32x4xf32>
    tpu.vector_store %arg20[%c0_22, %c16], %15 {strides = array<i32>} : memref<32x20xf32, #tpu.memory_space<vmem>>, vector<32x4xf32>,
    %c0_23 = arith.constant 0 : index
    %c0_24 = arith.constant 0 : index
    %17 = vector.load %arg20[%c0_23, %c0_24] : memref<32x20xf32, #tpu.memory_space<vmem>>, vector<32x20xf32>
    %18 = arith.truncf %17 : vector<32x20xf32> to vector<32x20xbf16>
    %19 = arith.truncf %2 : vector<20x16xf32> to vector<20x16xbf16>
    %cst_25 = arith.constant dense<0.000000e+00> : vector<32x16xf32>
    %20 = tpu.matmul %18, %19, %cst_25 {dimension_numbers = #tpu.dot_dimension_numbers<[1], [0], [0], [1], [0, 0, 1, 1], [], []>} : vector<32x20xbf16>, vector<20x16xbf16>, vector<32x16xf32> -> vector<32x16xf32>
    %21 = vector.broadcast %3 : vector<1x16xf32> to vector<32x16xf32>
    %22 = arith.addf %20, %21 : vector<32x16xf32>
    %c0_26 = arith.constant 0 : index
    %c0_27 = arith.constant 0 : index
    %23 = vector.load %arg18[%c0_26, %c0_27] : memref<64x16xf32, #tpu.memory_space<vmem>>, vector<32x16xf32>
    tpu.vector_store %arg18[%c0_26, %c0_27], %22 {strides = array<i32>} : memref<64x16xf32, #tpu.memory_space<vmem>>, vector<32x16xf32>,
    %c1_28 = arith.constant 1 : index
    %c0_29 = arith.constant 0 : index
    %c0_30 = arith.constant 0 : index
    %24 = vector.load %arg0[%c1_28, %c0_29, %c0_30] : memref<2x32x4xf32, #tpu.memory_space<vmem>>, vector<1x32x4xf32>
    %25 = vector.shape_cast %24 : vector<1x32x4xf32> to vector<32x4xf32>
    %c38 = arith.constant 38 : index
    %c0_31 = arith.constant 0 : index
    %26 = vector.load %arg16[%c38, %c0_31] : memref<72x4xf32, #tpu.memory_space<vmem>>, vector<32x4xf32>
    tpu.vector_store %arg16[%c38, %c0_31], %25 {strides = array<i32>} : memref<72x4xf32, #tpu.memory_space<vmem>>, vector<32x4xf32>,
    %c36 = arith.constant 36 : index
    %c0_32 = arith.constant 0 : index
    %27 = vector.load %arg16[%c36, %c0_32] : memref<72x4xf32, #tpu.memory_space<vmem>>, vector<32x4xf32>
    %c0_33 = arith.constant 0 : index
    %c0_34 = arith.constant 0 : index
    %28 = vector.load %arg20[%c0_33, %c0_34] : memref<32x20xf32, #tpu.memory_space<vmem>>, vector<32x4xf32>
    tpu.vector_store %arg20[%c0_33, %c0_34], %27 {strides = array<i32>} : memref<32x20xf32, #tpu.memory_space<vmem>>, vector<32x4xf32>,
    %c37 = arith.constant 37 : index
    %c0_35 = arith.constant 0 : index
    %29 = vector.load %arg16[%c37, %c0_35] : memref<72x4xf32, #tpu.memory_space<vmem>>, vector<32x4xf32>
    %c0_36 = arith.constant 0 : index
    %c4_37 = arith.constant 4 : index
    %30 = vector.load %arg20[%c0_36, %c4_37] : memref<32x20xf32, #tpu.memory_space<vmem>>, vector<32x4xf32>
    tpu.vector_store %arg20[%c0_36, %c4_37], %29 {strides = array<i32>} : memref<32x20xf32, #tpu.memory_space<vmem>>, vector<32x4xf32>,
    %c38_38 = arith.constant 38 : index
    %c0_39 = arith.constant 0 : index
    %31 = vector.load %arg16[%c38_38, %c0_39] : memref<72x4xf32, #tpu.memory_space<vmem>>, vector<32x4xf32>
    %c0_40 = arith.constant 0 : index
    %c8_41 = arith.constant 8 : index
    %32 = vector.load %arg20[%c0_40, %c8_41] : memref<32x20xf32, #tpu.memory_space<vmem>>, vector<32x4xf32>
    tpu.vector_store %arg20[%c0_40, %c8_41], %31 {strides = array<i32>} : memref<32x20xf32, #tpu.memory_space<vmem>>, vector<32x4xf32>,
    %c39 = arith.constant 39 : index
    %c0_42 = arith.constant 0 : index
    %33 = vector.load %arg16[%c39, %c0_42] : memref<72x4xf32, #tpu.memory_space<vmem>>, vector<32x4xf32>
    %c0_43 = arith.constant 0 : index
    %c12_44 = arith.constant 12 : index
    %34 = vector.load %arg20[%c0_43, %c12_44] : memref<32x20xf32, #tpu.memory_space<vmem>>, vector<32x4xf32>
    tpu.vector_store %arg20[%c0_43, %c12_44], %33 {strides = array<i32>} : memref<32x20xf32, #tpu.memory_space<vmem>>, vector<32x4xf32>,
    %c40 = arith.constant 40 : index
    %c0_45 = arith.constant 0 : index
    %35 = vector.load %arg16[%c40, %c0_45] : memref<72x4xf32, #tpu.memory_space<vmem>>, vector<32x4xf32>
    %c0_46 = arith.constant 0 : index
    %c16_47 = arith.constant 16 : index
    %36 = vector.load %arg20[%c0_46, %c16_47] : memref<32x20xf32, #tpu.memory_space<vmem>>, vector<32x4xf32>
    tpu.vector_store %arg20[%c0_46, %c16_47], %35 {strides = array<i32>} : memref<32x20xf32, #tpu.memory_space<vmem>>, vector<32x4xf32>,
    %c0_48 = arith.constant 0 : index
    %c0_49 = arith.constant 0 : index
    %37 = vector.load %arg20[%c0_48, %c0_49] : memref<32x20xf32, #tpu.memory_space<vmem>>, vector<32x20xf32>
    %38 = arith.truncf %37 : vector<32x20xf32> to vector<32x20xbf16>
    %39 = arith.truncf %2 : vector<20x16xf32> to vector<20x16xbf16>
    %cst_50 = arith.constant dense<0.000000e+00> : vector<32x16xf32>
    %40 = tpu.matmul %38, %39, %cst_50 {dimension_numbers = #tpu.dot_dimension_numbers<[1], [0], [0], [1], [0, 0, 1, 1], [], []>} : vector<32x20xbf16>, vector<20x16xbf16>, vector<32x16xf32> -> vector<32x16xf32>
    %41 = vector.broadcast %3 : vector<1x16xf32> to vector<32x16xf32>
    %42 = arith.addf %40, %41 : vector<32x16xf32>
    %c32 = arith.constant 32 : index
    %c0_51 = arith.constant 0 : index
    %43 = vector.load %arg18[%c32, %c0_51] : memref<64x16xf32, #tpu.memory_space<vmem>>, vector<32x16xf32>
    tpu.vector_store %arg18[%c32, %c0_51], %42 {strides = array<i32>} : memref<64x16xf32, #tpu.memory_space<vmem>>, vector<32x16xf32>,
    %c0_52 = arith.constant 0 : index
    %c0_53 = arith.constant 0 : index
    %44 = vector.load %arg18[%c0_52, %c0_53] : memref<64x16xf32, #tpu.memory_space<vmem>>, vector<64x16xf32>
    %cst_54 = arith.constant dense<0.000000e+00> : vector<16xf32>
    %45 = vector.multi_reduction <add>, %44, %cst_54 [0] : vector<64x16xf32> to vector<16xf32>
    %46 = vector.shape_cast %45 : vector<16xf32> to vector<1x16xf32>
    %cst_55 = arith.constant 6.400000e+01 : f32
    %47 = vector.broadcast %cst_55 : f32 to vector<1x16xf32>
    %48 = arith.divf %46, %47 : vector<1x16xf32>
    %49 = vector.broadcast %48 : vector<1x16xf32> to vector<64x16xf32>
    %50 = arith.subf %44, %49 : vector<64x16xf32>
    %51 = arith.mulf %50, %50 : vector<64x16xf32>
    %cst_56 = arith.constant dense<0.000000e+00> : vector<16xf32>
    %52 = vector.multi_reduction <add>, %51, %cst_56 [0] : vector<64x16xf32> to vector<16xf32>
    %53 = vector.shape_cast %52 : vector<16xf32> to vector<1x16xf32>
    %cst_57 = arith.constant 6.400000e+01 : f32
    %54 = vector.broadcast %cst_57 : f32 to vector<1x16xf32>
    %55 = arith.divf %53, %54 : vector<1x16xf32>
    %c0_58 = arith.constant 0 : index
    %c0_59 = arith.constant 0 : index
    %56 = vector.load %arg4[%c0_58, %c0_59] : memref<1x16xf32, #tpu.memory_space<vmem>>, vector<1x16xf32>
    %cst_60 = arith.constant 9.99999974E-6 : f32
    %57 = vector.broadcast %cst_60 : f32 to vector<1x16xf32>
    %58 = arith.addf %55, %57 : vector<1x16xf32>
    %59 = math.rsqrt %58 : vector<1x16xf32>
    %60 = arith.mulf %56, %59 : vector<1x16xf32>
    %c0_61 = arith.constant 0 : index
    %c0_62 = arith.constant 0 : index
    %61 = vector.load %arg5[%c0_61, %c0_62] : memref<1x16xf32, #tpu.memory_space<vmem>>, vector<1x16xf32>
    %62 = arith.mulf %48, %60 : vector<1x16xf32>
    %63 = arith.subf %61, %62 : vector<1x16xf32>
    %cst_63 = arith.constant 0.000000e+00 : f32
    %64 = vector.broadcast %cst_63 : f32 to vector<40x16xf32>
    %c0_64 = arith.constant 0 : index
    %c0_65 = arith.constant 0 : index
    %65 = vector.load %arg17[%c0_64, %c0_65] : memref<40x16xf32, #tpu.memory_space<vmem>>, vector<40x16xf32>
    tpu.vector_store %arg17[%c0_64, %c0_65], %64 {strides = array<i32>} : memref<40x16xf32, #tpu.memory_space<vmem>>, vector<40x16xf32>,
    %c0_66 = arith.constant 0 : index
    %c0_67 = arith.constant 0 : index
    %66 = vector.load %arg6[%c0_66, %c0_67] : memref<80x16xf32, #tpu.memory_space<vmem>>, vector<80x16xf32>
    %c0_68 = arith.constant 0 : index
    %c0_69 = arith.constant 0 : index
    %67 = vector.load %arg7[%c0_68, %c0_69] : memref<1x16xf32, #tpu.memory_space<vmem>>, vector<1x16xf32>
    %c0_70 = arith.constant 0 : index
    %c0_71 = arith.constant 0 : index
    %68 = tpu.strided_load %arg18[%c0_70, %c0_71] {strides = array<i32: 2, 1>} : memref<64x16xf32, #tpu.memory_space<vmem>>, vector<16x16xf32>
    %c1_72 = arith.constant 1 : index
    %c0_73 = arith.constant 0 : index
    %69 = tpu.strided_load %arg18[%c1_72, %c0_73] {strides = array<i32: 2, 1>} : memref<64x16xf32, #tpu.memory_space<vmem>>, vector<16x16xf32>
    %70 = vector.broadcast %60 : vector<1x16xf32> to vector<16x16xf32>
    %71 = arith.mulf %68, %70 : vector<16x16xf32>
    %72 = vector.broadcast %63 : vector<1x16xf32> to vector<16x16xf32>
    %73 = arith.addf %71, %72 : vector<16x16xf32>
    %cst_74 = arith.constant 0.000000e+00 : f32
    %74 = vector.broadcast %cst_74 : f32 to vector<16x16xf32>
    %75 = arith.maximumf %73, %74 : vector<16x16xf32>
    %76 = vector.broadcast %60 : vector<1x16xf32> to vector<16x16xf32>
    %77 = arith.mulf %69, %76 : vector<16x16xf32>
    %78 = vector.broadcast %63 : vector<1x16xf32> to vector<16x16xf32>
    %79 = arith.addf %77, %78 : vector<16x16xf32>
    %cst_75 = arith.constant 0.000000e+00 : f32
    %80 = vector.broadcast %cst_75 : f32 to vector<16x16xf32>
    %81 = arith.maximumf %79, %80 : vector<16x16xf32>
    %82 = arith.maximumf %75, %81 : vector<16x16xf32>
    %c2_76 = arith.constant 2 : index
    %c0_77 = arith.constant 0 : index
    %83 = vector.load %arg17[%c2_76, %c0_77] : memref<40x16xf32, #tpu.memory_space<vmem>>, vector<16x16xf32>
    tpu.vector_store %arg17[%c2_76, %c0_77], %82 {strides = array<i32>} : memref<40x16xf32, #tpu.memory_space<vmem>>, vector<16x16xf32>,
    %c0_78 = arith.constant 0 : index
    %c0_79 = arith.constant 0 : index
    %84 = vector.load %arg17[%c0_78, %c0_79] : memref<40x16xf32, #tpu.memory_space<vmem>>, vector<16x16xf32>
    %c0_80 = arith.constant 0 : index
    %c0_81 = arith.constant 0 : index
    %85 = vector.load %arg21[%c0_80, %c0_81] : memref<16x80xf32, #tpu.memory_space<vmem>>, vector<16x16xf32>
    tpu.vector_store %arg21[%c0_80, %c0_81], %84 {strides = array<i32>} : memref<16x80xf32, #tpu.memory_space<vmem>>, vector<16x16xf32>,
    %c1_82 = arith.constant 1 : index
    %c0_83 = arith.constant 0 : index
    %86 = vector.load %arg17[%c1_82, %c0_83] : memref<40x16xf32, #tpu.memory_space<vmem>>, vector<16x16xf32>
    %c0_84 = arith.constant 0 : index
    %c16_85 = arith.constant 16 : index
    %87 = vector.load %arg21[%c0_84, %c16_85] : memref<16x80xf32, #tpu.memory_space<vmem>>, vector<16x16xf32>
    tpu.vector_store %arg21[%c0_84, %c16_85], %86 {strides = array<i32>} : memref<16x80xf32, #tpu.memory_space<vmem>>, vector<16x16xf32>,
    %c2_86 = arith.constant 2 : index
    %c0_87 = arith.constant 0 : index
    %88 = vector.load %arg17[%c2_86, %c0_87] : memref<40x16xf32, #tpu.memory_space<vmem>>, vector<16x16xf32>
    %c0_88 = arith.constant 0 : index
    %c32_89 = arith.constant 32 : index
    %89 = vector.load %arg21[%c0_88, %c32_89] : memref<16x80xf32, #tpu.memory_space<vmem>>, vector<16x16xf32>
    tpu.vector_store %arg21[%c0_88, %c32_89], %88 {strides = array<i32>} : memref<16x80xf32, #tpu.memory_space<vmem>>, vector<16x16xf32>,
    %c3_90 = arith.constant 3 : index
    %c0_91 = arith.constant 0 : index
    %90 = vector.load %arg17[%c3_90, %c0_91] : memref<40x16xf32, #tpu.memory_space<vmem>>, vector<16x16xf32>
    %c0_92 = arith.constant 0 : index
    %c48 = arith.constant 48 : index
    %91 = vector.load %arg21[%c0_92, %c48] : memref<16x80xf32, #tpu.memory_space<vmem>>, vector<16x16xf32>
    tpu.vector_store %arg21[%c0_92, %c48], %90 {strides = array<i32>} : memref<16x80xf32, #tpu.memory_space<vmem>>, vector<16x16xf32>,
    %c4_93 = arith.constant 4 : index
    %c0_94 = arith.constant 0 : index
    %92 = vector.load %arg17[%c4_93, %c0_94] : memref<40x16xf32, #tpu.memory_space<vmem>>, vector<16x16xf32>
    %c0_95 = arith.constant 0 : index
    %c64 = arith.constant 64 : index
    %93 = vector.load %arg21[%c0_95, %c64] : memref<16x80xf32, #tpu.memory_space<vmem>>, vector<16x16xf32>
    tpu.vector_store %arg21[%c0_95, %c64], %92 {strides = array<i32>} : memref<16x80xf32, #tpu.memory_space<vmem>>, vector<16x16xf32>,
    %c0_96 = arith.constant 0 : index
    %c0_97 = arith.constant 0 : index
    %94 = vector.load %arg21[%c0_96, %c0_97] : memref<16x80xf32, #tpu.memory_space<vmem>>, vector<16x80xf32>
    %95 = arith.truncf %94 : vector<16x80xf32> to vector<16x80xbf16>
    %96 = arith.truncf %66 : vector<80x16xf32> to vector<80x16xbf16>
    %cst_98 = arith.constant dense<0.000000e+00> : vector<16x16xf32>
    %97 = tpu.matmul %95, %96, %cst_98 {dimension_numbers = #tpu.dot_dimension_numbers<[1], [0], [0], [1], [0, 0, 1, 1], [], []>} : vector<16x80xbf16>, vector<80x16xbf16>, vector<16x16xf32> -> vector<16x16xf32>
    %98 = vector.broadcast %67 : vector<1x16xf32> to vector<16x16xf32>
    %99 = arith.addf %97, %98 : vector<16x16xf32>
    %c0_99 = arith.constant 0 : index
    %c0_100 = arith.constant 0 : index
    %100 = vector.load %arg19[%c0_99, %c0_100] : memref<32x16xf32, #tpu.memory_space<vmem>>, vector<16x16xf32>
    tpu.vector_store %arg19[%c0_99, %c0_100], %99 {strides = array<i32>} : memref<32x16xf32, #tpu.memory_space<vmem>>, vector<16x16xf32>,
    %c32_101 = arith.constant 32 : index
    %c0_102 = arith.constant 0 : index
    %101 = tpu.strided_load %arg18[%c32_101, %c0_102] {strides = array<i32: 2, 1>} : memref<64x16xf32, #tpu.memory_space<vmem>>, vector<16x16xf32>
    %c33 = arith.constant 33 : index
    %c0_103 = arith.constant 0 : index
    %102 = tpu.strided_load %arg18[%c33, %c0_103] {strides = array<i32: 2, 1>} : memref<64x16xf32, #tpu.memory_space<vmem>>, vector<16x16xf32>
    %103 = vector.broadcast %60 : vector<1x16xf32> to vector<16x16xf32>
    %104 = arith.mulf %101, %103 : vector<16x16xf32>
    %105 = vector.broadcast %63 : vector<1x16xf32> to vector<16x16xf32>
    %106 = arith.addf %104, %105 : vector<16x16xf32>
    %cst_104 = arith.constant 0.000000e+00 : f32
    %107 = vector.broadcast %cst_104 : f32 to vector<16x16xf32>
    %108 = arith.maximumf %106, %107 : vector<16x16xf32>
    %109 = vector.broadcast %60 : vector<1x16xf32> to vector<16x16xf32>
    %110 = arith.mulf %102, %109 : vector<16x16xf32>
    %111 = vector.broadcast %63 : vector<1x16xf32> to vector<16x16xf32>
    %112 = arith.addf %110, %111 : vector<16x16xf32>
    %cst_105 = arith.constant 0.000000e+00 : f32
    %113 = vector.broadcast %cst_105 : f32 to vector<16x16xf32>
    %114 = arith.maximumf %112, %113 : vector<16x16xf32>
    %115 = arith.maximumf %108, %114 : vector<16x16xf32>
    %c22 = arith.constant 22 : index
    %c0_106 = arith.constant 0 : index
    %116 = vector.load %arg17[%c22, %c0_106] : memref<40x16xf32, #tpu.memory_space<vmem>>, vector<16x16xf32>
    tpu.vector_store %arg17[%c22, %c0_106], %115 {strides = array<i32>} : memref<40x16xf32, #tpu.memory_space<vmem>>, vector<16x16xf32>,
    %c20 = arith.constant 20 : index
    %c0_107 = arith.constant 0 : index
    %117 = vector.load %arg17[%c20, %c0_107] : memref<40x16xf32, #tpu.memory_space<vmem>>, vector<16x16xf32>
    %c0_108 = arith.constant 0 : index
    %c0_109 = arith.constant 0 : index
    %118 = vector.load %arg21[%c0_108, %c0_109] : memref<16x80xf32, #tpu.memory_space<vmem>>, vector<16x16xf32>
    tpu.vector_store %arg21[%c0_108, %c0_109], %117 {strides = array<i32>} : memref<16x80xf32, #tpu.memory_space<vmem>>, vector<16x16xf32>,
    %c21 = arith.constant 21 : index
    %c0_110 = arith.constant 0 : index
    %119 = vector.load %arg17[%c21, %c0_110] : memref<40x16xf32, #tpu.memory_space<vmem>>, vector<16x16xf32>
    %c0_111 = arith.constant 0 : index
    %c16_112 = arith.constant 16 : index
    %120 = vector.load %arg21[%c0_111, %c16_112] : memref<16x80xf32, #tpu.memory_space<vmem>>, vector<16x16xf32>
    tpu.vector_store %arg21[%c0_111, %c16_112], %119 {strides = array<i32>} : memref<16x80xf32, #tpu.memory_space<vmem>>, vector<16x16xf32>,
    %c22_113 = arith.constant 22 : index
    %c0_114 = arith.constant 0 : index
    %121 = vector.load %arg17[%c22_113, %c0_114] : memref<40x16xf32, #tpu.memory_space<vmem>>, vector<16x16xf32>
    %c0_115 = arith.constant 0 : index
    %c32_116 = arith.constant 32 : index
    %122 = vector.load %arg21[%c0_115, %c32_116] : memref<16x80xf32, #tpu.memory_space<vmem>>, vector<16x16xf32>
    tpu.vector_store %arg21[%c0_115, %c32_116], %121 {strides = array<i32>} : memref<16x80xf32, #tpu.memory_space<vmem>>, vector<16x16xf32>,
    %c23 = arith.constant 23 : index
    %c0_117 = arith.constant 0 : index
    %123 = vector.load %arg17[%c23, %c0_117] : memref<40x16xf32, #tpu.memory_space<vmem>>, vector<16x16xf32>
    %c0_118 = arith.constant 0 : index
    %c48_119 = arith.constant 48 : index
    %124 = vector.load %arg21[%c0_118, %c48_119] : memref<16x80xf32, #tpu.memory_space<vmem>>, vector<16x16xf32>
    tpu.vector_store %arg21[%c0_118, %c48_119], %123 {strides = array<i32>} : memref<16x80xf32, #tpu.memory_space<vmem>>, vector<16x16xf32>,
    %c24 = arith.constant 24 : index
    %c0_120 = arith.constant 0 : index
    %125 = vector.load %arg17[%c24, %c0_120] : memref<40x16xf32, #tpu.memory_space<vmem>>, vector<16x16xf32>
    %c0_121 = arith.constant 0 : index
    %c64_122 = arith.constant 64 : index
    %126 = vector.load %arg21[%c0_121, %c64_122] : memref<16x80xf32, #tpu.memory_space<vmem>>, vector<16x16xf32>
    tpu.vector_store %arg21[%c0_121, %c64_122], %125 {strides = array<i32>} : memref<16x80xf32, #tpu.memory_space<vmem>>, vector<16x16xf32>,
    %c0_123 = arith.constant 0 : index
    %c0_124 = arith.constant 0 : index
    %127 = vector.load %arg21[%c0_123, %c0_124] : memref<16x80xf32, #tpu.memory_space<vmem>>, vector<16x80xf32>
    %128 = arith.truncf %127 : vector<16x80xf32> to vector<16x80xbf16>
    %129 = arith.truncf %66 : vector<80x16xf32> to vector<80x16xbf16>
    %cst_125 = arith.constant dense<0.000000e+00> : vector<16x16xf32>
    %130 = tpu.matmul %128, %129, %cst_125 {dimension_numbers = #tpu.dot_dimension_numbers<[1], [0], [0], [1], [0, 0, 1, 1], [], []>} : vector<16x80xbf16>, vector<80x16xbf16>, vector<16x16xf32> -> vector<16x16xf32>
    %131 = vector.broadcast %67 : vector<1x16xf32> to vector<16x16xf32>
    %132 = arith.addf %130, %131 : vector<16x16xf32>
    %c16_126 = arith.constant 16 : index
    %c0_127 = arith.constant 0 : index
    %133 = vector.load %arg19[%c16_126, %c0_127] : memref<32x16xf32, #tpu.memory_space<vmem>>, vector<16x16xf32>
    tpu.vector_store %arg19[%c16_126, %c0_127], %132 {strides = array<i32>} : memref<32x16xf32, #tpu.memory_space<vmem>>, vector<16x16xf32>,
    %c0_128 = arith.constant 0 : index
    %c0_129 = arith.constant 0 : index
    %134 = vector.load %arg19[%c0_128, %c0_129] : memref<32x16xf32, #tpu.memory_space<vmem>>, vector<32x16xf32>
    %cst_130 = arith.constant dense<0.000000e+00> : vector<16xf32>
    %135 = vector.multi_reduction <add>, %134, %cst_130 [0] : vector<32x16xf32> to vector<16xf32>
    %136 = vector.shape_cast %135 : vector<16xf32> to vector<1x16xf32>
    %cst_131 = arith.constant 3.200000e+01 : f32
    %137 = vector.broadcast %cst_131 : f32 to vector<1x16xf32>
    %138 = arith.divf %136, %137 : vector<1x16xf32>
    %139 = vector.broadcast %138 : vector<1x16xf32> to vector<32x16xf32>
    %140 = arith.subf %134, %139 : vector<32x16xf32>
    %141 = arith.mulf %140, %140 : vector<32x16xf32>
    %cst_132 = arith.constant dense<0.000000e+00> : vector<16xf32>
    %142 = vector.multi_reduction <add>, %141, %cst_132 [0] : vector<32x16xf32> to vector<16xf32>
    %143 = vector.shape_cast %142 : vector<16xf32> to vector<1x16xf32>
    %cst_133 = arith.constant 3.200000e+01 : f32
    %144 = vector.broadcast %cst_133 : f32 to vector<1x16xf32>
    %145 = arith.divf %143, %144 : vector<1x16xf32>
    %c0_134 = arith.constant 0 : index
    %c0_135 = arith.constant 0 : index
    %146 = vector.load %arg8[%c0_134, %c0_135] : memref<1x16xf32, #tpu.memory_space<vmem>>, vector<1x16xf32>
    %cst_136 = arith.constant 9.99999974E-6 : f32
    %147 = vector.broadcast %cst_136 : f32 to vector<1x16xf32>
    %148 = arith.addf %145, %147 : vector<1x16xf32>
    %149 = math.rsqrt %148 : vector<1x16xf32>
    %150 = arith.mulf %146, %149 : vector<1x16xf32>
    %c0_137 = arith.constant 0 : index
    %c0_138 = arith.constant 0 : index
    %151 = vector.load %arg9[%c0_137, %c0_138] : memref<1x16xf32, #tpu.memory_space<vmem>>, vector<1x16xf32>
    %152 = arith.mulf %138, %150 : vector<1x16xf32>
    %153 = arith.subf %151, %152 : vector<1x16xf32>
    %c0_139 = arith.constant 0 : index
    %c0_140 = arith.constant 0 : index
    %154 = vector.load %arg10[%c0_139, %c0_140] : memref<4x16xf32, #tpu.memory_space<vmem>>, vector<4x16xf32>
    %c0_141 = arith.constant 0 : index
    %c0_142 = arith.constant 0 : index
    %155 = vector.load %arg11[%c0_141, %c0_142] : memref<1x16xf32, #tpu.memory_space<vmem>>, vector<1x16xf32>
    %c0_143 = arith.constant 0 : index
    %c0_144 = arith.constant 0 : index
    %156 = vector.load %arg12[%c0_143, %c0_144] : memref<32x24xf32, #tpu.memory_space<vmem>>, vector<32x24xf32>
    %c0_145 = arith.constant 0 : index
    %c0_146 = arith.constant 0 : index
    %157 = vector.load %arg13[%c0_145, %c0_146] : memref<1x24xf32, #tpu.memory_space<vmem>>, vector<1x24xf32>
    %c0_147 = arith.constant 0 : index
    %c0_148 = arith.constant 0 : index
    %158 = tpu.strided_load %arg19[%c0_147, %c0_148] {strides = array<i32: 2, 1>} : memref<32x16xf32, #tpu.memory_space<vmem>>, vector<8x16xf32>
    %c1_149 = arith.constant 1 : index
    %c0_150 = arith.constant 0 : index
    %159 = tpu.strided_load %arg19[%c1_149, %c0_150] {strides = array<i32: 2, 1>} : memref<32x16xf32, #tpu.memory_space<vmem>>, vector<8x16xf32>
    %160 = vector.broadcast %150 : vector<1x16xf32> to vector<8x16xf32>
    %161 = arith.mulf %158, %160 : vector<8x16xf32>
    %162 = vector.broadcast %153 : vector<1x16xf32> to vector<8x16xf32>
    %163 = arith.addf %161, %162 : vector<8x16xf32>
    %cst_151 = arith.constant 0.000000e+00 : f32
    %164 = vector.broadcast %cst_151 : f32 to vector<8x16xf32>
    %165 = arith.maximumf %163, %164 : vector<8x16xf32>
    %166 = vector.broadcast %150 : vector<1x16xf32> to vector<8x16xf32>
    %167 = arith.mulf %159, %166 : vector<8x16xf32>
    %168 = vector.broadcast %153 : vector<1x16xf32> to vector<8x16xf32>
    %169 = arith.addf %167, %168 : vector<8x16xf32>
    %cst_152 = arith.constant 0.000000e+00 : f32
    %170 = vector.broadcast %cst_152 : f32 to vector<8x16xf32>
    %171 = arith.maximumf %169, %170 : vector<8x16xf32>
    %172 = arith.maximumf %165, %171 : vector<8x16xf32>
    %c0_153 = arith.constant 0 : index
    %c0_154 = arith.constant 0 : index
    %c0_155 = arith.constant 0 : index
    %173 = vector.load %arg1[%c0_153, %c0_154, %c0_155] : memref<2x8x4xf32, #tpu.memory_space<vmem>>, vector<1x8x4xf32>
    %174 = vector.shape_cast %173 : vector<1x8x4xf32> to vector<8x4xf32>
    %175 = arith.truncf %174 : vector<8x4xf32> to vector<8x4xbf16>
    %176 = arith.truncf %154 : vector<4x16xf32> to vector<4x16xbf16>
    %cst_156 = arith.constant dense<0.000000e+00> : vector<8x16xf32>
    %177 = tpu.matmul %175, %176, %cst_156 {dimension_numbers = #tpu.dot_dimension_numbers<[1], [0], [0], [1], [0, 0, 1, 1], [], []>} : vector<8x4xbf16>, vector<4x16xbf16>, vector<8x16xf32> -> vector<8x16xf32>
    %178 = vector.broadcast %155 : vector<1x16xf32> to vector<8x16xf32>
    %179 = arith.addf %177, %178 : vector<8x16xf32>
    %c0_157 = arith.constant 0 : index
    %c0_158 = arith.constant 0 : index
    %180 = vector.load %arg14[%c0_157, %c0_158] : memref<8x64xf32, #tpu.memory_space<vmem>>, vector<8x16xf32>
    tpu.vector_store %arg14[%c0_157, %c0_158], %179 {strides = array<i32>} : memref<8x64xf32, #tpu.memory_space<vmem>>, vector<8x16xf32>,
    %c0_159 = arith.constant 0 : index
    %c16_160 = arith.constant 16 : index
    %181 = vector.load %arg14[%c0_159, %c16_160] : memref<8x64xf32, #tpu.memory_space<vmem>>, vector<8x16xf32>
    tpu.vector_store %arg14[%c0_159, %c16_160], %172 {strides = array<i32>} : memref<8x64xf32, #tpu.memory_space<vmem>>, vector<8x16xf32>,
    %c0_161 = arith.constant 0 : index
    %c0_162 = arith.constant 0 : index
    %182 = vector.load %arg14[%c0_161, %c0_162] : memref<8x64xf32, #tpu.memory_space<vmem>>, vector<8x32xf32>
    %183 = arith.truncf %182 : vector<8x32xf32> to vector<8x32xbf16>
    %184 = arith.truncf %156 : vector<32x24xf32> to vector<32x24xbf16>
    %cst_163 = arith.constant dense<0.000000e+00> : vector<8x24xf32>
    %185 = tpu.matmul %183, %184, %cst_163 {dimension_numbers = #tpu.dot_dimension_numbers<[1], [0], [0], [1], [0, 0, 1, 1], [], []>} : vector<8x32xbf16>, vector<32x24xbf16>, vector<8x24xf32> -> vector<8x24xf32>
    %186 = vector.broadcast %157 : vector<1x24xf32> to vector<8x24xf32>
    %187 = arith.addf %185, %186 : vector<8x24xf32>
    %c0_164 = arith.constant 0 : index
    %c0_165 = arith.constant 0 : index
    %188 = vector.load %arg15[%c0_164, %c0_165] : memref<8x48xf32, #tpu.memory_space<vmem>>, vector<8x24xf32>
    tpu.vector_store %arg15[%c0_164, %c0_165], %187 {strides = array<i32>} : memref<8x48xf32, #tpu.memory_space<vmem>>, vector<8x24xf32>,
    %c16_166 = arith.constant 16 : index
    %c0_167 = arith.constant 0 : index
    %189 = tpu.strided_load %arg19[%c16_166, %c0_167] {strides = array<i32: 2, 1>} : memref<32x16xf32, #tpu.memory_space<vmem>>, vector<8x16xf32>
    %c17 = arith.constant 17 : index
    %c0_168 = arith.constant 0 : index
    %190 = tpu.strided_load %arg19[%c17, %c0_168] {strides = array<i32: 2, 1>} : memref<32x16xf32, #tpu.memory_space<vmem>>, vector<8x16xf32>
    %191 = vector.broadcast %150 : vector<1x16xf32> to vector<8x16xf32>
    %192 = arith.mulf %189, %191 : vector<8x16xf32>
    %193 = vector.broadcast %153 : vector<1x16xf32> to vector<8x16xf32>
    %194 = arith.addf %192, %193 : vector<8x16xf32>
    %cst_169 = arith.constant 0.000000e+00 : f32
    %195 = vector.broadcast %cst_169 : f32 to vector<8x16xf32>
    %196 = arith.maximumf %194, %195 : vector<8x16xf32>
    %197 = vector.broadcast %150 : vector<1x16xf32> to vector<8x16xf32>
    %198 = arith.mulf %190, %197 : vector<8x16xf32>
    %199 = vector.broadcast %153 : vector<1x16xf32> to vector<8x16xf32>
    %200 = arith.addf %198, %199 : vector<8x16xf32>
    %cst_170 = arith.constant 0.000000e+00 : f32
    %201 = vector.broadcast %cst_170 : f32 to vector<8x16xf32>
    %202 = arith.maximumf %200, %201 : vector<8x16xf32>
    %203 = arith.maximumf %196, %202 : vector<8x16xf32>
    %c1_171 = arith.constant 1 : index
    %c0_172 = arith.constant 0 : index
    %c0_173 = arith.constant 0 : index
    %204 = vector.load %arg1[%c1_171, %c0_172, %c0_173] : memref<2x8x4xf32, #tpu.memory_space<vmem>>, vector<1x8x4xf32>
    %205 = vector.shape_cast %204 : vector<1x8x4xf32> to vector<8x4xf32>
    %206 = arith.truncf %205 : vector<8x4xf32> to vector<8x4xbf16>
    %207 = arith.truncf %154 : vector<4x16xf32> to vector<4x16xbf16>
    %cst_174 = arith.constant dense<0.000000e+00> : vector<8x16xf32>
    %208 = tpu.matmul %206, %207, %cst_174 {dimension_numbers = #tpu.dot_dimension_numbers<[1], [0], [0], [1], [0, 0, 1, 1], [], []>} : vector<8x4xbf16>, vector<4x16xbf16>, vector<8x16xf32> -> vector<8x16xf32>
    %209 = vector.broadcast %155 : vector<1x16xf32> to vector<8x16xf32>
    %210 = arith.addf %208, %209 : vector<8x16xf32>
    %c0_175 = arith.constant 0 : index
    %c32_176 = arith.constant 32 : index
    %211 = vector.load %arg14[%c0_175, %c32_176] : memref<8x64xf32, #tpu.memory_space<vmem>>, vector<8x16xf32>
    tpu.vector_store %arg14[%c0_175, %c32_176], %210 {strides = array<i32>} : memref<8x64xf32, #tpu.memory_space<vmem>>, vector<8x16xf32>,
    %c0_177 = arith.constant 0 : index
    %c48_178 = arith.constant 48 : index
    %212 = vector.load %arg14[%c0_177, %c48_178] : memref<8x64xf32, #tpu.memory_space<vmem>>, vector<8x16xf32>
    tpu.vector_store %arg14[%c0_177, %c48_178], %203 {strides = array<i32>} : memref<8x64xf32, #tpu.memory_space<vmem>>, vector<8x16xf32>,
    %c0_179 = arith.constant 0 : index
    %c32_180 = arith.constant 32 : index
    %213 = vector.load %arg14[%c0_179, %c32_180] : memref<8x64xf32, #tpu.memory_space<vmem>>, vector<8x32xf32>
    %214 = arith.truncf %213 : vector<8x32xf32> to vector<8x32xbf16>
    %215 = arith.truncf %156 : vector<32x24xf32> to vector<32x24xbf16>
    %cst_181 = arith.constant dense<0.000000e+00> : vector<8x24xf32>
    %216 = tpu.matmul %214, %215, %cst_181 {dimension_numbers = #tpu.dot_dimension_numbers<[1], [0], [0], [1], [0, 0, 1, 1], [], []>} : vector<8x32xbf16>, vector<32x24xbf16>, vector<8x24xf32> -> vector<8x24xf32>
    %217 = vector.broadcast %157 : vector<1x24xf32> to vector<8x24xf32>
    %218 = arith.addf %216, %217 : vector<8x24xf32>
    %c0_182 = arith.constant 0 : index
    %c24_183 = arith.constant 24 : index
    %219 = vector.load %arg15[%c0_182, %c24_183] : memref<8x48xf32, #tpu.memory_space<vmem>>, vector<8x24xf32>
    tpu.vector_store %arg15[%c0_182, %c24_183], %218 {strides = array<i32>} : memref<8x48xf32, #tpu.memory_space<vmem>>, vector<8x24xf32>,
    return
  }
}

</mosaic_0001>

<llo_original>
// kernel: fast_conv_forward.1
$region0: #{fast_conv_forward.1}
  #allocation0 [shape = 'u32[]', space=smem, size = 0x4, offset = 0x4, fixed_abs, tag = 'smem constant byte address 0x4 - core index']
  #allocation1 [shape = 'u32[144,128]{1,0:T(1,128)}', space=vmem, size = 0x12000, scoped, tag = 'internal scratch']
  #allocation2 [shape = 'f32[72,4]{1,0:T(8,128)}', space=vmem, size = 0x9000, scoped, tag = 'scratch operand']
  #allocation3 [shape = 'f32[40,16]{1,0:T(8,128)}', space=vmem, size = 0x5000, scoped, tag = 'scratch operand']
  #allocation4 [shape = 'f32[64,16]{1,0:T(8,128)}', space=vmem, size = 0x8000, scoped, tag = 'scratch operand']
  #allocation5 [shape = 'f32[32,16]{1,0:T(8,128)}', space=vmem, size = 0x4000, scoped, tag = 'scratch operand']
  #allocation6 [shape = 'f32[32,20]{1,0:T(8,128)}', space=vmem, size = 0x4000, scoped, tag = 'scratch operand']
  #allocation7 [shape = 'f32[16,80]{1,0:T(8,128)}', space=vmem, size = 0x2000, scoped, tag = 'scratch operand']
  %s0 = inlined_call_operand.vmem [shape: f32[2,32,4], index: 0, kind: input, shape index: {}]
  %s1 = inlined_call_operand.vmem [shape: f32[2,8,4], index: 1, kind: input, shape index: {}]
  %s2 = inlined_call_operand.vmem [shape: f32[20,16], index: 2, kind: input, shape index: {}]
  %s3 = inlined_call_operand.vmem [shape: f32[1,16], index: 3, kind: input, shape index: {}]
  %s4 = inlined_call_operand.vmem [shape: f32[1,16], index: 4, kind: input, shape index: {}]
  %s5 = inlined_call_operand.vmem [shape: f32[1,16], index: 5, kind: input, shape index: {}]
  %s6 = inlined_call_operand.vmem [shape: f32[80,16], index: 6, kind: input, shape index: {}]
  %s7 = inlined_call_operand.vmem [shape: f32[1,16], index: 7, kind: input, shape index: {}]
  %s8 = inlined_call_operand.vmem [shape: f32[1,16], index: 8, kind: input, shape index: {}]
  %s9 = inlined_call_operand.vmem [shape: f32[1,16], index: 9, kind: input, shape index: {}]
  %s10 = inlined_call_operand.vmem [shape: f32[4,16], index: 10, kind: input, shape index: {}]
  %s11 = inlined_call_operand.vmem [shape: f32[1,16], index: 11, kind: input, shape index: {}]
  %s12 = inlined_call_operand.vmem [shape: f32[32,24], index: 12, kind: input, shape index: {}]
  %s13 = inlined_call_operand.vmem [shape: f32[1,24], index: 13, kind: input, shape index: {}]
  %s14 = inlined_call_operand.vmem [shape: f32[8,64], index: 14, kind: output, shape index: {0}]
  %s15 = inlined_call_operand.vmem [shape: f32[8,48], index: 15, kind: output, shape index: {1}]
  %16 = xla_tuple %s14, %s15
  %s17 = sld [smem:[#allocation0]]
  $region74: #{fast_conv_forward.1} parent=0
    _
  %s19 = ssub.s32 1, %s17
  %s20 = scalar_select 0, %s19, %s17
  // Predicated region
  $region2: #{fast_conv_forward.1} parent=0 // pred_check
    _
  $region3: #{fast_conv_forward.1} parent=0 // pred_check_branch
    %22 = sbr.rel (0) target = $region5
  $region4: #{fast_conv_forward.1} parent=0 // pred_region
    _
  $region5: #{fast_conv_forward.1} parent=0 // pred_fallthru
    _
  // Predicated region
  $region6: #{fast_conv_forward.1} parent=0 // pred_check
    _
  $region7: #{fast_conv_forward.1} parent=0 // pred_check_branch
    %24 = sbr.rel (0) target = $region9
  $region8: #{fast_conv_forward.1} parent=0 // pred_region
    _
  $region9: #{fast_conv_forward.1} parent=0 // pred_fallthru
    _
  // Predicated region
  $region10: #{fast_conv_forward.1} parent=0 // pred_check
    _
  $region11: #{fast_conv_forward.1} parent=0 // pred_check_branch
    %26 = sbr.rel (0) target = $region13
  $region12: #{fast_conv_forward.1} parent=0 // pred_region
    _
  $region13: #{fast_conv_forward.1} parent=0 // pred_fallthru
    _
  // Predicated region
  $region14: #{fast_conv_forward.1} parent=0 // pred_check
    _
  $region15: #{fast_conv_forward.1} parent=0 // pred_check_branch
    %28 = sbr.rel (0) target = $region17
  $region16: #{fast_conv_forward.1} parent=0 // pred_region
    _
  $region17: #{fast_conv_forward.1} parent=0 // pred_fallthru
    _
  // Predicated region
  $region18: #{fast_conv_forward.1} parent=0 // pred_check
    _
  $region19: #{fast_conv_forward.1} parent=0 // pred_check_branch
    %30 = sbr.rel (0) target = $region21
  $region20: #{fast_conv_forward.1} parent=0 // pred_region
    _
  $region21: #{fast_conv_forward.1} parent=0 // pred_fallthru
    _
  // Predicated region
  $region22: #{fast_conv_forward.1} parent=0 // pred_check
    _
  $region23: #{fast_conv_forward.1} parent=0 // pred_check_branch
    %32 = sbr.rel (0) target = $region25
  $region24: #{fast_conv_forward.1} parent=0 // pred_region
    _
  $region25: #{fast_conv_forward.1} parent=0 // pred_fallthru
    _
  // Predicated region
  $region26: #{fast_conv_forward.1} parent=0 // pred_check
    _
  $region27: #{fast_conv_forward.1} parent=0 // pred_check_branch
    %34 = sbr.rel (0) target = $region29
  $region28: #{fast_conv_forward.1} parent=0 // pred_region
    _
  $region29: #{fast_conv_forward.1} parent=0 // pred_fallthru
    _
  // Predicated region
  $region30: #{fast_conv_forward.1} parent=0 // pred_check
    _
  $region31: #{fast_conv_forward.1} parent=0 // pred_check_branch
    %36 = sbr.rel (0) target = $region33
  $region32: #{fast_conv_forward.1} parent=0 // pred_region
    _
  $region33: #{fast_conv_forward.1} parent=0 // pred_fallthru
    _
  // Predicated region
  $region34: #{fast_conv_forward.1} parent=0 // pred_check
    _
  $region35: #{fast_conv_forward.1} parent=0 // pred_check_branch
    %38 = sbr.rel (0) target = $region37
  $region36: #{fast_conv_forward.1} parent=0 // pred_region
    _
  $region37: #{fast_conv_forward.1} parent=0 // pred_fallthru
    _
  // Predicated region
  $region38: #{fast_conv_forward.1} parent=0 // pred_check
    _
  $region39: #{fast_conv_forward.1} parent=0 // pred_check_branch
    %40 = sbr.rel (0) target = $region41
  $region40: #{fast_conv_forward.1} parent=0 // pred_region
    _
  $region41: #{fast_conv_forward.1} parent=0 // pred_fallthru
    _
  // Predicated region
  $region42: #{fast_conv_forward.1} parent=0 // pred_check
    _
  $region43: #{fast_conv_forward.1} parent=0 // pred_check_branch
    %42 = sbr.rel (0) target = $region45
  $region44: #{fast_conv_forward.1} parent=0 // pred_region
    _
  $region45: #{fast_conv_forward.1} parent=0 // pred_fallthru
    _
  // Predicated region
  $region46: #{fast_conv_forward.1} parent=0 // pred_check
    _
  $region47: #{fast_conv_forward.1} parent=0 // pred_check_branch
    %44 = sbr.rel (0) target = $region49
  $region48: #{fast_conv_forward.1} parent=0 // pred_region
    _
  $region49: #{fast_conv_forward.1} parent=0 // pred_fallthru
    _
  // Predicated region
  $region50: #{fast_conv_forward.1} parent=0 // pred_check
    _
  $region51: #{fast_conv_forward.1} parent=0 // pred_check_branch
    %46 = sbr.rel (0) target = $region53
  $region52: #{fast_conv_forward.1} parent=0 // pred_region
    _
  $region53: #{fast_conv_forward.1} parent=0 // pred_fallthru
    _
  // Predicated region
  $region54: #{fast_conv_forward.1} parent=0 // pred_check
    _
  $region55: #{fast_conv_forward.1} parent=0 // pred_check_branch
    %48 = sbr.rel (0) target = $region57
  $region56: #{fast_conv_forward.1} parent=0 // pred_region
    _
  $region57: #{fast_conv_forward.1} parent=0 // pred_fallthru
    _
  %vm50 = vcmask 31744
  %51 = vst.msk [vmem:[#allocation2] sm:$0xff] %vm50, 0.0
  %52 = vst.msk [vmem:[#allocation2 + $0x8] sm:$0xff] %vm50, 0.0
  %53 = vst.msk [vmem:[#allocation2 + $0x10] sm:$0xff] %vm50, 0.0
  %54 = vst.msk [vmem:[#allocation2 + $0x18] sm:$0xff] %vm50, 0.0
  %55 = vst.msk [vmem:[#allocation2 + $0x20] sm:$0xff] %vm50, 0.0
  %56 = vst.msk [vmem:[#allocation2 + $0x28] sm:$0xff] %vm50, 0.0
  %57 = vst.msk [vmem:[#allocation2 + $0x30] sm:$0xff] %vm50, 0.0
  %58 = vst.msk [vmem:[#allocation2 + $0x38] sm:$0xff] %vm50, 0.0
  %59 = vst.msk [vmem:[#allocation2 + $0x40] sm:$0xff] %vm50, 0.0
  %v60 = vld [vmem:[%s2] sm:$0xff]
  %v61 = vld [vmem:[%s2 + $0x8] sm:$0xff]
  %v62 = vld [vmem:[%s2 + $0x10] sm:$0xf]
  %v63 = vld [vmem:[%s3] sm:$0x1]
  %v64 = vld [vmem:[%s0] sm:$0xff]
  %v65 = vld [vmem:[%s0 + $0x8] sm:$0xff]
  %v66 = vld [vmem:[%s0 + $0x10] sm:$0xff]
  %v67 = vld [vmem:[%s0 + $0x18] sm:$0xff]
  %68 = vst.msk [vmem:[#allocation2 + $0x2] sm:$0xff] %vm50, %v64
  %69 = vst.msk [vmem:[#allocation2 + $0xa] sm:$0xff] %vm50, %v65
  %70 = vst.msk [vmem:[#allocation2 + $0x12] sm:$0xff] %vm50, %v66
  %71 = vst.msk [vmem:[#allocation2 + $0x1a] sm:$0xff] %vm50, %v67
  %v72 = vld [vmem:[#allocation2] sm:$0xff]
  %v73 = vld [vmem:[#allocation2 + $0x8] sm:$0xff]
  %v74 = vld [vmem:[#allocation2 + $0x10] sm:$0xff]
  %v75 = vld [vmem:[#allocation2 + $0x18] sm:$0xff]
  %76 = vst.msk [vmem:[#allocation6] sm:$0xff] %vm50, %v72
  %77 = vst.msk [vmem:[#allocation6 + $0x8] sm:$0xff] %vm50, %v73
  %78 = vst.msk [vmem:[#allocation6 + $0x10] sm:$0xff] %vm50, %v74
  %79 = vst.msk [vmem:[#allocation6 + $0x18] sm:$0xff] %vm50, %v75
  %v80 = vld [vmem:[#allocation2 + $0x1] sm:$0xff]
  %v81 = vld [vmem:[#allocation2 + $0x9] sm:$0xff]
  %v82 = vld [vmem:[#allocation2 + $0x11] sm:$0xff]
  %v83 = vld [vmem:[#allocation2 + $0x19] sm:$0xff]
  %88 = vrot.lane.b32.xlu0 %v80, 4
  %v89 = vpop.permute.xlu0 %88
  %90 = vrot.lane.b32.xlu0 %v81, 4
  %v91 = vpop.permute.xlu0 %90
  %92 = vrot.lane.b32.xlu0 %v82, 4
  %v93 = vpop.permute.xlu0 %92
  %94 = vrot.lane.b32.xlu0 %v83, 4
  %v95 = vpop.permute.xlu0 %94
  %vm100 = vcmask 64544
  %101 = vst.msk [vmem:[#allocation6] sm:$0xff] %vm100, %v89
  %102 = vst.msk [vmem:[#allocation6 + $0x8] sm:$0xff] %vm100, %v91
  %103 = vst.msk [vmem:[#allocation6 + $0x10] sm:$0xff] %vm100, %v93
  %104 = vst.msk [vmem:[#allocation6 + $0x18] sm:$0xff] %vm100, %v95
  %v105 = vld [vmem:[#allocation2 + $0x2] sm:$0xff]
  %v106 = vld [vmem:[#allocation2 + $0xa] sm:$0xff]
  %v107 = vld [vmem:[#allocation2 + $0x12] sm:$0xff]
  %v108 = vld [vmem:[#allocation2 + $0x1a] sm:$0xff]
  %113 = vrot.lane.b32.xlu0 %v105, 8
  %v114 = vpop.permute.xlu0 %113
  %115 = vrot.lane.b32.xlu0 %v106, 8
  %v116 = vpop.permute.xlu0 %115
  %117 = vrot.lane.b32.xlu0 %v107, 8
  %v118 = vpop.permute.xlu0 %117
  %119 = vrot.lane.b32.xlu0 %v108, 8
  %v120 = vpop.permute.xlu0 %119
  %vm125 = vcmask 97344
  %126 = vst.msk [vmem:[#allocation6] sm:$0xff] %vm125, %v114
  %127 = vst.msk [vmem:[#allocation6 + $0x8] sm:$0xff] %vm125, %v116
  %128 = vst.msk [vmem:[#allocation6 + $0x10] sm:$0xff] %vm125, %v118
  %129 = vst.msk [vmem:[#allocation6 + $0x18] sm:$0xff] %vm125, %v120
  %v130 = vld [vmem:[#allocation2 + $0x3] sm:$0xff]
  %v131 = vld [vmem:[#allocation2 + $0xb] sm:$0xff]
  %v132 = vld [vmem:[#allocation2 + $0x13] sm:$0xff]
  %v133 = vld [vmem:[#allocation2 + $0x1b] sm:$0xff]
  %138 = vrot.lane.b32.xlu0 %v130, 12
  %v139 = vpop.permute.xlu0 %138
  %140 = vrot.lane.b32.xlu0 %v131, 12
  %v141 = vpop.permute.xlu0 %140
  %142 = vrot.lane.b32.xlu0 %v132, 12
  %v143 = vpop.permute.xlu0 %142
  %144 = vrot.lane.b32.xlu0 %v133, 12
  %v145 = vpop.permute.xlu0 %144
  %vm150 = vcmask 130144
  %151 = vst.msk [vmem:[#allocation6] sm:$0xff] %vm150, %v139
  %152 = vst.msk [vmem:[#allocation6 + $0x8] sm:$0xff] %vm150, %v141
  %153 = vst.msk [vmem:[#allocation6 + $0x10] sm:$0xff] %vm150, %v143
  %154 = vst.msk [vmem:[#allocation6 + $0x18] sm:$0xff] %vm150, %v145
  %v155 = vld [vmem:[#allocation2 + $0x4] sm:$0xff]
  %v156 = vld [vmem:[#allocation2 + $0xc] sm:$0xff]
  %v157 = vld [vmem:[#allocation2 + $0x14] sm:$0xff]
  %v158 = vld [vmem:[#allocation2 + $0x1c] sm:$0xff]
  %163 = vrot.lane.b32.xlu0 %v155, 16
  %v164 = vpop.permute.xlu0 %163
  %165 = vrot.lane.b32.xlu0 %v156, 16
  %v166 = vpop.permute.xlu0 %165
  %167 = vrot.lane.b32.xlu0 %v157, 16
  %v168 = vpop.permute.xlu0 %167
  %169 = vrot.lane.b32.xlu0 %v158, 16
  %v170 = vpop.permute.xlu0 %169
  %vm175 = vcmask 162944
  %176 = vst.msk [vmem:[#allocation6] sm:$0xff] %vm175, %v164
  %177 = vst.msk [vmem:[#allocation6 + $0x8] sm:$0xff] %vm175, %v166
  %178 = vst.msk [vmem:[#allocation6 + $0x10] sm:$0xff] %vm175, %v168
  %179 = vst.msk [vmem:[#allocation6 + $0x18] sm:$0xff] %vm175, %v170
  %v180 = vld [vmem:[#allocation6] sm:$0xff]
  %v181 = vld [vmem:[#allocation6 + $0x8] sm:$0xff]
  %v182 = vld [vmem:[#allocation6 + $0x10] sm:$0xff]
  %v183 = vld [vmem:[#allocation6 + $0x18] sm:$0xff]
  %v184 = vpack.c.bf16 %v181, %v180
  %v185 = vpack.c.bf16 %v183, %v182
  %v186 = vpack.c.bf16 %v61, %v60
  %v187 = vpack.c.bf16 %v62, %v62
  %v189 = vlaneseq
  %v190 = vshrl.u32 %v189, 7
  %v191 = vsub.s32 0, %v190
  %v192 = vrot.slane %v63, %v191
  %vm194 = vcmask 162816
  %v196 = vsel %vm194, %v184, 0
  %v199 = vsel %vm194, %v185, 0
  %vm201 = vcmask 1041408
  %v203 = vsel %vm201, %v187, 0
  %205 = vmatprep.subr.bf16.mxu0 0
  %206 = vmatpush1.bf16.msra.mxu0 0
  %207 = vmatprep.subr.bf16.mxu0 0
  %208 = vmatpush1.bf16.msra.mxu0 0
  %209 = vmatprep.subr.bf16.mxu0 0
  %210 = vmatpush1.bf16.msra.mxu0 0
  %211 = vmatprep.subr.bf16.mxu0 0
  %212 = vmatpush1.bf16.msra.mxu0 0
  %213 = vmatprep.subr.bf16.mxu0 0
  %214 = vmatpush1.bf16.msra.mxu0 0
  %215 = vmatprep.subr.bf16.mxu0 0
  %216 = vmatpush1.bf16.msra.mxu0 0
  %217 = vmatprep.subr.bf16.mxu0 0
  %218 = vmatpush1.bf16.msra.mxu0 %v203
  %219 = vmatprep.subr.bf16.mxu0 0
  %220 = vmatpush1.bf16.msra.mxu0 %v186
  %221 = vmatprep.subr.bf16.mxu0 0
  %222 = vmatpush2.bf16.msra.mxu0 0
  %223 = vmatprep.subr.bf16.mxu0 0
  %224 = vmatpush2.bf16.msra.mxu0 0
  %225 = vmatprep.subr.bf16.mxu0 0
  %226 = vmatpush2.bf16.msra.mxu0 0
  %227 = vmatprep.subr.bf16.mxu0 0
  %228 = vmatpush2.bf16.msra.mxu0 0
  %229 = vmatprep.subr.bf16.mxu0 0
  %230 = vmatpush2.bf16.msra.mxu0 0
  %231 = vmatprep.subr.bf16.mxu0 0
  %232 = vmatpush2.bf16.msra.mxu0 0
  %233 = vmatprep.subr.bf16.mxu0 0
  %234 = vmatpush2.bf16.msra.mxu0 0
  %235 = vmatprep.subr.bf16.mxu0 0
  %236 = vmatpush2.bf16.msra.mxu0 0
  %237 = vmatprep.mubr.bf16.mxu0 0
  %238 = vmatmul.mubr.bf16.gmra.mxu0 %v196
  %v239 = vpop.f32.mrf.mxu0
  %v240 = vadd.f32 %v192, %v239
  %v241 = vpop.f32.mrf.mxu0
  %v242 = vpop.f32.mrf.mxu0
  %v243 = vadd.f32 %v192, %v242
  %v244 = vpop.f32.mrf.mxu0
  %245 = vmatprep.mubr.bf16.mxu0 0
  %246 = vmatmul.mubr.bf16.gmra.mxu0 %v199
  %v247 = vpop.f32.mrf.mxu0
  %v248 = vadd.f32 %v192, %v247
  %v249 = vpop.f32.mrf.mxu0
  %v250 = vpop.f32.mrf.mxu0
  %v251 = vadd.f32 %v192, %v250
  %v252 = vpop.f32.mrf.mxu0
  %253 = vdwg.mxu0
  %vm254 = vcmask 130048
  %255 = vst.msk [vmem:[#allocation4] sm:$0xff] %vm254, %v240
  %256 = vst.msk [vmem:[#allocation4 + $0x8] sm:$0xff] %vm254, %v243
  %257 = vst.msk [vmem:[#allocation4 + $0x10] sm:$0xff] %vm254, %v248
  %258 = vst.msk [vmem:[#allocation4 + $0x18] sm:$0xff] %vm254, %v251
  %s259 = scalar_lea.vmem %s0, 32
  %v260 = vld [vmem:[%s259] sm:$0xff]
  %v261 = vld [vmem:[%s259 + $0x8] sm:$0xff]
  %v262 = vld [vmem:[%s259 + $0x10] sm:$0xff]
  %v263 = vld [vmem:[%s259 + $0x18] sm:$0xff]
  %264 = vst.msk [vmem:[#allocation2 + $0x26] sm:$0xff] %vm50, %v260
  %265 = vst.msk [vmem:[#allocation2 + $0x2e] sm:$0xff] %vm50, %v261
  %266 = vst.msk [vmem:[#allocation2 + $0x36] sm:$0xff] %vm50, %v262
  %267 = vst.msk [vmem:[#allocation2 + $0x3e] sm:$0xff] %vm50, %v263
  %v268 = vld [vmem:[#allocation2 + $0x24] sm:$0xff]
  %v269 = vld [vmem:[#allocation2 + $0x2c] sm:$0xff]
  %v270 = vld [vmem:[#allocation2 + $0x34] sm:$0xff]
  %v271 = vld [vmem:[#allocation2 + $0x3c] sm:$0xff]
  %272 = vst.msk [vmem:[#allocation6] sm:$0xff] %vm50, %v268
  %273 = vst.msk [vmem:[#allocation6 + $0x8] sm:$0xff] %vm50, %v269
  %274 = vst.msk [vmem:[#allocation6 + $0x10] sm:$0xff] %vm50, %v270
  %275 = vst.msk [vmem:[#allocation6 + $0x18] sm:$0xff] %vm50, %v271
  %v276 = vld [vmem:[#allocation2 + $0x25] sm:$0xff]
  %v277 = vld [vmem:[#allocation2 + $0x2d] sm:$0xff]
  %v278 = vld [vmem:[#allocation2 + $0x35] sm:$0xff]
  %v279 = vld [vmem:[#allocation2 + $0x3d] sm:$0xff]
  %284 = vrot.lane.b32.xlu0 %v276, 4
  %v285 = vpop.permute.xlu0 %284
  %286 = vrot.lane.b32.xlu0 %v277, 4
  %v287 = vpop.permute.xlu0 %286
  %288 = vrot.lane.b32.xlu0 %v278, 4
  %v289 = vpop.permute.xlu0 %288
  %290 = vrot.lane.b32.xlu0 %v279, 4
  %v291 = vpop.permute.xlu0 %290
  %296 = vst.msk [vmem:[#allocation6] sm:$0xff] %vm100, %v285
  %297 = vst.msk [vmem:[#allocation6 + $0x8] sm:$0xff] %vm100, %v287
  %298 = vst.msk [vmem:[#allocation6 + $0x10] sm:$0xff] %vm100, %v289
  %299 = vst.msk [vmem:[#allocation6 + $0x18] sm:$0xff] %vm100, %v291
  %v300 = vld [vmem:[#allocation2 + $0x26] sm:$0xff]
  %v301 = vld [vmem:[#allocation2 + $0x2e] sm:$0xff]
  %v302 = vld [vmem:[#allocation2 + $0x36] sm:$0xff]
  %v303 = vld [vmem:[#allocation2 + $0x3e] sm:$0xff]
  %308 = vrot.lane.b32.xlu0 %v300, 8
  %v309 = vpop.permute.xlu0 %308
  %310 = vrot.lane.b32.xlu0 %v301, 8
  %v311 = vpop.permute.xlu0 %310
  %312 = vrot.lane.b32.xlu0 %v302, 8
  %v313 = vpop.permute.xlu0 %312
  %314 = vrot.lane.b32.xlu0 %v303, 8
  %v315 = vpop.permute.xlu0 %314
  %320 = vst.msk [vmem:[#allocation6] sm:$0xff] %vm125, %v309
  %321 = vst.msk [vmem:[#allocation6 + $0x8] sm:$0xff] %vm125, %v311
  %322 = vst.msk [vmem:[#allocation6 + $0x10] sm:$0xff] %vm125, %v313
  %323 = vst.msk [vmem:[#allocation6 + $0x18] sm:$0xff] %vm125, %v315
  %v324 = vld [vmem:[#allocation2 + $0x27] sm:$0xff]
  %v325 = vld [vmem:[#allocation2 + $0x2f] sm:$0xff]
  %v326 = vld [vmem:[#allocation2 + $0x37] sm:$0xff]
  %v327 = vld [vmem:[#allocation2 + $0x3f] sm:$0xff]
  %332 = vrot.lane.b32.xlu0 %v324, 12
  %v333 = vpop.permute.xlu0 %332
  %334 = vrot.lane.b32.xlu0 %v325, 12
  %v335 = vpop.permute.xlu0 %334
  %336 = vrot.lane.b32.xlu0 %v326, 12
  %v337 = vpop.permute.xlu0 %336
  %338 = vrot.lane.b32.xlu0 %v327, 12
  %v339 = vpop.permute.xlu0 %338
  %344 = vst.msk [vmem:[#allocation6] sm:$0xff] %vm150, %v333
  %345 = vst.msk [vmem:[#allocation6 + $0x8] sm:$0xff] %vm150, %v335
  %346 = vst.msk [vmem:[#allocation6 + $0x10] sm:$0xff] %vm150, %v337
  %347 = vst.msk [vmem:[#allocation6 + $0x18] sm:$0xff] %vm150, %v339
  %v348 = vld [vmem:[#allocation2 + $0x28] sm:$0xff]
  %v349 = vld [vmem:[#allocation2 + $0x30] sm:$0xff]
  %v350 = vld [vmem:[#allocation2 + $0x38] sm:$0xff]
  %v351 = vld [vmem:[#allocation2 + $0x40] sm:$0xff]
  %356 = vrot.lane.b32.xlu0 %v348, 16
  %v357 = vpop.permute.xlu0 %356
  %358 = vrot.lane.b32.xlu0 %v349, 16
  %v359 = vpop.permute.xlu0 %358
  %360 = vrot.lane.b32.xlu0 %v350, 16
  %v361 = vpop.permute.xlu0 %360
  %362 = vrot.lane.b32.xlu0 %v351, 16
  %v363 = vpop.permute.xlu0 %362
  %368 = vst.msk [vmem:[#allocation6] sm:$0xff] %vm175, %v357
  %369 = vst.msk [vmem:[#allocation6 + $0x8] sm:$0xff] %vm175, %v359
  %370 = vst.msk [vmem:[#allocation6 + $0x10] sm:$0xff] %vm175, %v361
  %371 = vst.msk [vmem:[#allocation6 + $0x18] sm:$0xff] %vm175, %v363
  %v372 = vld [vmem:[#allocation6] sm:$0xff]
  %v373 = vld [vmem:[#allocation6 + $0x8] sm:$0xff]
  %v374 = vld [vmem:[#allocation6 + $0x10] sm:$0xff]
  %v375 = vld [vmem:[#allocation6 + $0x18] sm:$0xff]
  %v376 = vpack.c.bf16 %v373, %v372
  %v377 = vpack.c.bf16 %v375, %v374
  %v379 = vsel %vm194, %v376, 0
  %v382 = vsel %vm194, %v377, 0
  %384 = vmatprep.subr.bf16.mxu0 0
  %385 = vmatpush1.bf16.msra.mxu0 0
  %386 = vmatprep.subr.bf16.mxu0 0
  %387 = vmatpush1.bf16.msra.mxu0 0
  %388 = vmatprep.subr.bf16.mxu0 0
  %389 = vmatpush1.bf16.msra.mxu0 0
  %390 = vmatprep.subr.bf16.mxu0 0
  %391 = vmatpush1.bf16.msra.mxu0 0
  %392 = vmatprep.subr.bf16.mxu0 0
  %393 = vmatpush1.bf16.msra.mxu0 0
  %394 = vmatprep.subr.bf16.mxu0 0
  %395 = vmatpush1.bf16.msra.mxu0 0
  %396 = vmatprep.subr.bf16.mxu0 0
  %397 = vmatpush1.bf16.msra.mxu0 %v203
  %398 = vmatprep.subr.bf16.mxu0 0
  %399 = vmatpush1.bf16.msra.mxu0 %v186
  %400 = vmatprep.subr.bf16.mxu0 0
  %401 = vmatpush2.bf16.msra.mxu0 0
  %402 = vmatprep.subr.bf16.mxu0 0
  %403 = vmatpush2.bf16.msra.mxu0 0
  %404 = vmatprep.subr.bf16.mxu0 0
  %405 = vmatpush2.bf16.msra.mxu0 0
  %406 = vmatprep.subr.bf16.mxu0 0
  %407 = vmatpush2.bf16.msra.mxu0 0
  %408 = vmatprep.subr.bf16.mxu0 0
  %409 = vmatpush2.bf16.msra.mxu0 0
  %410 = vmatprep.subr.bf16.mxu0 0
  %411 = vmatpush2.bf16.msra.mxu0 0
  %412 = vmatprep.subr.bf16.mxu0 0
  %413 = vmatpush2.bf16.msra.mxu0 0
  %414 = vmatprep.subr.bf16.mxu0 0
  %415 = vmatpush2.bf16.msra.mxu0 0
  %416 = vmatprep.mubr.bf16.mxu0 0
  %417 = vmatmul.mubr.bf16.gmra.mxu0 %v379
  %v418 = vpop.f32.mrf.mxu0
  %v419 = vadd.f32 %v192, %v418
  %v420 = vpop.f32.mrf.mxu0
  %v421 = vpop.f32.mrf.mxu0
  %v422 = vadd.f32 %v192, %v421
  %v423 = vpop.f32.mrf.mxu0
  %424 = vmatprep.mubr.bf16.mxu0 0
  %425 = vmatmul.mubr.bf16.gmra.mxu0 %v382
  %v426 = vpop.f32.mrf.mxu0
  %v427 = vadd.f32 %v192, %v426
  %v428 = vpop.f32.mrf.mxu0
  %v429 = vpop.f32.mrf.mxu0
  %v430 = vadd.f32 %v192, %v429
  %v431 = vpop.f32.mrf.mxu0
  %432 = vdwg.mxu0
  %433 = vst.msk [vmem:[#allocation4 + $0x20] sm:$0xff] %vm254, %v419
  %434 = vst.msk [vmem:[#allocation4 + $0x28] sm:$0xff] %vm254, %v422
  %435 = vst.msk [vmem:[#allocation4 + $0x30] sm:$0xff] %vm254, %v427
  %436 = vst.msk [vmem:[#allocation4 + $0x38] sm:$0xff] %vm254, %v430
  %v437 = vld [vmem:[#allocation4] sm:$0xff]
  %v438 = vld [vmem:[#allocation4 + $0x8] sm:$0xff]
  %v439 = vld [vmem:[#allocation4 + $0x10] sm:$0xff]
  %v440 = vld [vmem:[#allocation4 + $0x18] sm:$0xff]
  %v441 = vld [vmem:[#allocation4 + $0x20] sm:$0xff]
  %v442 = vld [vmem:[#allocation4 + $0x28] sm:$0xff]
  %v443 = vld [vmem:[#allocation4 + $0x30] sm:$0xff]
  %v444 = vld [vmem:[#allocation4 + $0x38] sm:$0xff]
  %v445 = vsel %vm254, %v437, 0.0
  %v446 = vsel %vm254, %v438, 0.0
  %v447 = vadd.f32 %v445, %v446
  %v448 = vsel %vm254, %v439, 0.0
  %v449 = vadd.f32 %v447, %v448
  %v450 = vsel %vm254, %v440, 0.0
  %v451 = vadd.f32 %v449, %v450
  %v452 = vsel %vm254, %v441, 0.0
  %v453 = vadd.f32 %v451, %v452
  %v454 = vsel %vm254, %v442, 0.0
  %v455 = vadd.f32 %v453, %v454
  %v456 = vsel %vm254, %v443, 0.0
  %v457 = vadd.f32 %v455, %v456
  %v458 = vsel %vm254, %v444, 0.0
  %v459 = vadd.f32 %v457, %v458
  %v460 = vrot.slane %v459, 4
  %v461 = vadd.f32 %v459, %v460
  %v462 = vrot.slane %v461, 2
  %v463 = vadd.f32 %v461, %v462
  %v464 = vrot.slane %v463, 1
  %v465 = vadd.f32 %v463, %v464
  %v466 = vrcp.pop 64.0
  %v467 = vmul.f32 %v465, %v466
  %v468 = vsub.f32 %v437, %v467
  %v469 = vsub.f32 %v438, %v467
  %v470 = vsub.f32 %v439, %v467
  %v471 = vsub.f32 %v440, %v467
  %v472 = vsub.f32 %v441, %v467
  %v473 = vsub.f32 %v442, %v467
  %v474 = vsub.f32 %v443, %v467
  %v475 = vsub.f32 %v444, %v467
  %v476 = vmul.f32 %v468, %v468
  %v477 = vmul.f32 %v469, %v469
  %v478 = vmul.f32 %v470, %v470
  %v479 = vmul.f32 %v471, %v471
  %v480 = vmul.f32 %v472, %v472
  %v481 = vmul.f32 %v473, %v473
  %v482 = vmul.f32 %v474, %v474
  %v483 = vmul.f32 %v475, %v475
  %v484 = vsel %vm254, %v476, 0.0
  %v485 = vsel %vm254, %v477, 0.0
  %v486 = vadd.f32 %v484, %v485
  %v487 = vsel %vm254, %v478, 0.0
  %v488 = vadd.f32 %v486, %v487
  %v489 = vsel %vm254, %v479, 0.0
  %v490 = vadd.f32 %v488, %v489
  %v491 = vsel %vm254, %v480, 0.0
  %v492 = vadd.f32 %v490, %v491
  %v493 = vsel %vm254, %v481, 0.0
  %v494 = vadd.f32 %v492, %v493
  %v495 = vsel %vm254, %v482, 0.0
  %v496 = vadd.f32 %v494, %v495
  %v497 = vsel %vm254, %v483, 0.0
  %v498 = vadd.f32 %v496, %v497
  %v499 = vrot.slane %v498, 4
  %v500 = vadd.f32 %v498, %v499
  %v501 = vrot.slane %v500, 2
  %v502 = vadd.f32 %v500, %v501
  %v503 = vrot.slane %v502, 1
  %v504 = vadd.f32 %v502, %v503
  %v505 = vmul.f32 %v504, %v466
  %v506 = vld [vmem:[%s4] sm:$0x1]
  %v507 = vadd.f32 %v505, 1e-05
  %v508 = vrsqrt.pop %v507
  %v509 = vmul.f32 %v506, %v508
  %v510 = vld [vmem:[%s5] sm:$0x1]
  %v511 = vmul.f32 %v467, %v509
  %v512 = vsub.f32 %v510, %v511
  %513 = vst.msk [vmem:[#allocation3] sm:$0xff] %vm254, 0.0
  %514 = vst.msk [vmem:[#allocation3 + $0x8] sm:$0xff] %vm254, 0.0
  %515 = vst.msk [vmem:[#allocation3 + $0x10] sm:$0xff] %vm254, 0.0
  %516 = vst.msk [vmem:[#allocation3 + $0x18] sm:$0xff] %vm254, 0.0
  %517 = vst.msk [vmem:[#allocation3 + $0x20] sm:$0xff] %vm254, 0.0
  %v518 = vld [vmem:[%s6] sm:$0xff]
  %v519 = vld [vmem:[%s6 + $0x8] sm:$0xff]
  %v520 = vld [vmem:[%s6 + $0x10] sm:$0xff]
  %v521 = vld [vmem:[%s6 + $0x18] sm:$0xff]
  %v522 = vld [vmem:[%s6 + $0x20] sm:$0xff]
  %v523 = vld [vmem:[%s6 + $0x28] sm:$0xff]
  %v524 = vld [vmem:[%s6 + $0x30] sm:$0xff]
  %v525 = vld [vmem:[%s6 + $0x38] sm:$0xff]
  %v526 = vld [vmem:[%s6 + $0x40] sm:$0xff]
  %v527 = vld [vmem:[%s6 + $0x48] sm:$0xff]
  %v528 = vld [vmem:[%s7] sm:$0x1]
  %v529 = vld [vmem:[#allocation4] ss:$2 sm:$0xff]
  %s530 = scalar_lea.vmem [#allocation4], 16
  %v531 = vld [vmem:[%s530] ss:$2 sm:$0xff]
  %s532 = scalar_lea.vmem [#allocation4], 1
  %v533 = vld [vmem:[%s532] ss:$2 sm:$0xff]
  %s534 = scalar_lea.vmem [#allocation4], 17
  %v535 = vld [vmem:[%s534] ss:$2 sm:$0xff]
  %v537 = vlaneseq
  %v538 = vshrl.u32 %v537, 7
  %v539 = vsub.s32 0, %v538
  %v540 = vrot.slane %v509, %v539
  %v542 = vmul.f32 %v529, %v540
  %v543 = vmul.f32 %v531, %v540
  %v545 = vlaneseq
  %v546 = vshrl.u32 %v545, 7
  %v547 = vsub.s32 0, %v546
  %v548 = vrot.slane %v512, %v547
  %v550 = vadd.f32 %v542, %v548
  %v551 = vadd.f32 %v543, %v548
  %v552 = vmax.f32 %v550, 0.0
  %v553 = vmax.f32 %v551, 0.0
  %v554 = vmul.f32 %v533, %v540
  %v555 = vmul.f32 %v535, %v540
  %v556 = vadd.f32 %v554, %v548
  %v557 = vadd.f32 %v555, %v548
  %v558 = vmax.f32 %v556, 0.0
  %v559 = vmax.f32 %v557, 0.0
  %v560 = vmax.f32 %v552, %v558
  %v561 = vmax.f32 %v553, %v559
  %562 = vst.msk [vmem:[#allocation3 + $0x2] sm:$0xff] %vm254, %v560
  %563 = vst.msk [vmem:[#allocation3 + $0xa] sm:$0xff] %vm254, %v561
  %v564 = vld [vmem:[#allocation3] sm:$0xff]
  %v565 = vld [vmem:[#allocation3 + $0x8] sm:$0xff]
  %566 = vst.msk [vmem:[#allocation7] sm:$0xff] %vm254, %v564
  %567 = vst.msk [vmem:[#allocation7 + $0x8] sm:$0xff] %vm254, %v565
  %v568 = vld [vmem:[#allocation3 + $0x1] sm:$0xff]
  %v569 = vld [vmem:[#allocation3 + $0x9] sm:$0xff]
  %572 = vrot.lane.b32.xlu0 %v568, 16
  %v573 = vpop.permute.xlu0 %572
  %574 = vrot.lane.b32.xlu0 %v569, 16
  %v575 = vpop.permute.xlu0 %574
  %vm578 = vcmask 261248
  %579 = vst.msk [vmem:[#allocation7] sm:$0xff] %vm578, %v573
  %580 = vst.msk [vmem:[#allocation7 + $0x8] sm:$0xff] %vm578, %v575
  %v581 = vld [vmem:[#allocation3 + $0x2] sm:$0xff]
  %v582 = vld [vmem:[#allocation3 + $0xa] sm:$0xff]
  %585 = vrot.lane.b32.xlu0 %v581, 32
  %v586 = vpop.permute.xlu0 %585
  %587 = vrot.lane.b32.xlu0 %v582, 32
  %v588 = vpop.permute.xlu0 %587
  %vm591 = vcmask 392448
  %592 = vst.msk [vmem:[#allocation7] sm:$0xff] %vm591, %v586
  %593 = vst.msk [vmem:[#allocation7 + $0x8] sm:$0xff] %vm591, %v588
  %v594 = vld [vmem:[#allocation3 + $0x3] sm:$0xff]
  %v595 = vld [vmem:[#allocation3 + $0xb] sm:$0xff]
  %598 = vrot.lane.b32.xlu0 %v594, 48
  %v599 = vpop.permute.xlu0 %598
  %600 = vrot.lane.b32.xlu0 %v595, 48
  %v601 = vpop.permute.xlu0 %600
  %vm604 = vcmask 523648
  %605 = vst.msk [vmem:[#allocation7] sm:$0xff] %vm604, %v599
  %606 = vst.msk [vmem:[#allocation7 + $0x8] sm:$0xff] %vm604, %v601
  %v607 = vld [vmem:[#allocation3 + $0x4] sm:$0xff]
  %v608 = vld [vmem:[#allocation3 + $0xc] sm:$0xff]
  %611 = vrot.lane.b32.xlu0 %v607, 64
  %v612 = vpop.permute.xlu0 %611
  %613 = vrot.lane.b32.xlu0 %v608, 64
  %v614 = vpop.permute.xlu0 %613
  %vm617 = vcmask 654848
  %618 = vst.msk [vmem:[#allocation7] sm:$0xff] %vm617, %v612
  %619 = vst.msk [vmem:[#allocation7 + $0x8] sm:$0xff] %vm617, %v614
  %v620 = vld [vmem:[#allocation7] sm:$0xff]
  %v621 = vld [vmem:[#allocation7 + $0x8] sm:$0xff]
  %v622 = vpack.c.bf16 %v621, %v620
  %v623 = vpack.c.bf16 %v519, %v518
  %v624 = vpack.c.bf16 %v521, %v520
  %v625 = vpack.c.bf16 %v523, %v522
  %v626 = vpack.c.bf16 %v525, %v524
  %v627 = vpack.c.bf16 %v527, %v526
  %v629 = vlaneseq
  %v630 = vshrl.u32 %v629, 7
  %v631 = vsub.s32 0, %v630
  %v632 = vrot.slane %v528, %v631
  %vm634 = vcmask 654336
  %v636 = vsel %vm634, %v622, 0
  %638 = vmatprep.subr.bf16.mxu0 0
  %639 = vmatpush1.bf16.msra.mxu0 0
  %640 = vmatprep.subr.bf16.mxu0 0
  %641 = vmatpush1.bf16.msra.mxu0 0
  %642 = vmatprep.subr.bf16.mxu0 0
  %643 = vmatpush1.bf16.msra.mxu0 0
  %644 = vmatprep.subr.bf16.mxu0 0
  %645 = vmatpush1.bf16.msra.mxu0 %v627
  %646 = vmatprep.subr.bf16.mxu0 0
  %647 = vmatpush1.bf16.msra.mxu0 %v626
  %648 = vmatprep.subr.bf16.mxu0 0
  %649 = vmatpush1.bf16.msra.mxu0 %v625
  %650 = vmatprep.subr.bf16.mxu0 0
  %651 = vmatpush1.bf16.msra.mxu0 %v624
  %652 = vmatprep.subr.bf16.mxu0 0
  %653 = vmatpush1.bf16.msra.mxu0 %v623
  %654 = vmatprep.subr.bf16.mxu0 0
  %655 = vmatpush2.bf16.msra.mxu0 0
  %656 = vmatprep.subr.bf16.mxu0 0
  %657 = vmatpush2.bf16.msra.mxu0 0
  %658 = vmatprep.subr.bf16.mxu0 0
  %659 = vmatpush2.bf16.msra.mxu0 0
  %660 = vmatprep.subr.bf16.mxu0 0
  %661 = vmatpush2.bf16.msra.mxu0 0
  %662 = vmatprep.subr.bf16.mxu0 0
  %663 = vmatpush2.bf16.msra.mxu0 0
  %664 = vmatprep.subr.bf16.mxu0 0
  %665 = vmatpush2.bf16.msra.mxu0 0
  %666 = vmatprep.subr.bf16.mxu0 0
  %667 = vmatpush2.bf16.msra.mxu0 0
  %668 = vmatprep.subr.bf16.mxu0 0
  %669 = vmatpush2.bf16.msra.mxu0 0
  %670 = vmatprep.mubr.bf16.mxu0 0
  %671 = vmatmul.mubr.bf16.gmra.mxu0 %v636
  %v672 = vpop.f32.mrf.mxu0
  %v673 = vadd.f32 %v632, %v672
  %v674 = vpop.f32.mrf.mxu0
  %v675 = vpop.f32.mrf.mxu0
  %v676 = vadd.f32 %v632, %v675
  %v677 = vpop.f32.mrf.mxu0
  %678 = vdwg.mxu0
  %679 = vst.msk [vmem:[#allocation5] sm:$0xff] %vm254, %v673
  %680 = vst.msk [vmem:[#allocation5 + $0x8] sm:$0xff] %vm254, %v676
  %s681 = scalar_lea.vmem [#allocation4], 32
  %v682 = vld [vmem:[%s681] ss:$2 sm:$0xff]
  %s683 = scalar_lea.vmem [#allocation4], 48
  %v684 = vld [vmem:[%s683] ss:$2 sm:$0xff]
  %s685 = scalar_lea.vmem [#allocation4], 33
  %v686 = vld [vmem:[%s685] ss:$2 sm:$0xff]
  %s687 = scalar_lea.vmem [#allocation4], 49
  %v688 = vld [vmem:[%s687] ss:$2 sm:$0xff]
  %v689 = vmul.f32 %v682, %v540
  %v690 = vmul.f32 %v684, %v540
  %v691 = vadd.f32 %v689, %v548
  %v692 = vadd.f32 %v690, %v548
  %v693 = vmax.f32 %v691, 0.0
  %v694 = vmax.f32 %v692, 0.0
  %v695 = vmul.f32 %v686, %v540
  %v696 = vmul.f32 %v688, %v540
  %v697 = vadd.f32 %v695, %v548
  %v698 = vadd.f32 %v696, %v548
  %v699 = vmax.f32 %v697, 0.0
  %v700 = vmax.f32 %v698, 0.0
  %v701 = vmax.f32 %v693, %v699
  %v702 = vmax.f32 %v694, %v700
  %703 = vst.msk [vmem:[#allocation3 + $0x16] sm:$0xff] %vm254, %v701
  %704 = vst.msk [vmem:[#allocation3 + $0x1e] sm:$0xff] %vm254, %v702
  %v705 = vld [vmem:[#allocation3 + $0x14] sm:$0xff]
  %v706 = vld [vmem:[#allocation3 + $0x1c] sm:$0xff]
  %707 = vst.msk [vmem:[#allocation7] sm:$0xff] %vm254, %v705
  %708 = vst.msk [vmem:[#allocation7 + $0x8] sm:$0xff] %vm254, %v706
  %v709 = vld [vmem:[#allocation3 + $0x15] sm:$0xff]
  %v710 = vld [vmem:[#allocation3 + $0x1d] sm:$0xff]
  %713 = vrot.lane.b32.xlu0 %v709, 16
  %v714 = vpop.permute.xlu0 %713
  %715 = vrot.lane.b32.xlu0 %v710, 16
  %v716 = vpop.permute.xlu0 %715
  %719 = vst.msk [vmem:[#allocation7] sm:$0xff] %vm578, %v714
  %720 = vst.msk [vmem:[#allocation7 + $0x8] sm:$0xff] %vm578, %v716
  %v721 = vld [vmem:[#allocation3 + $0x16] sm:$0xff]
  %v722 = vld [vmem:[#allocation3 + $0x1e] sm:$0xff]
  %725 = vrot.lane.b32.xlu0 %v721, 32
  %v726 = vpop.permute.xlu0 %725
  %727 = vrot.lane.b32.xlu0 %v722, 32
  %v728 = vpop.permute.xlu0 %727
  %731 = vst.msk [vmem:[#allocation7] sm:$0xff] %vm591, %v726
  %732 = vst.msk [vmem:[#allocation7 + $0x8] sm:$0xff] %vm591, %v728
  %v733 = vld [vmem:[#allocation3 + $0x17] sm:$0xff]
  %v734 = vld [vmem:[#allocation3 + $0x1f] sm:$0xff]
  %737 = vrot.lane.b32.xlu0 %v733, 48
  %v738 = vpop.permute.xlu0 %737
  %739 = vrot.lane.b32.xlu0 %v734, 48
  %v740 = vpop.permute.xlu0 %739
  %743 = vst.msk [vmem:[#allocation7] sm:$0xff] %vm604, %v738
  %744 = vst.msk [vmem:[#allocation7 + $0x8] sm:$0xff] %vm604, %v740
  %v745 = vld [vmem:[#allocation3 + $0x18] sm:$0xff]
  %v746 = vld [vmem:[#allocation3 + $0x20] sm:$0xff]
  %749 = vrot.lane.b32.xlu0 %v745, 64
  %v750 = vpop.permute.xlu0 %749
  %751 = vrot.lane.b32.xlu0 %v746, 64
  %v752 = vpop.permute.xlu0 %751
  %755 = vst.msk [vmem:[#allocation7] sm:$0xff] %vm617, %v750
  %756 = vst.msk [vmem:[#allocation7 + $0x8] sm:$0xff] %vm617, %v752
  %v757 = vld [vmem:[#allocation7] sm:$0xff]
  %v758 = vld [vmem:[#allocation7 + $0x8] sm:$0xff]
  %v759 = vpack.c.bf16 %v758, %v757
  %v761 = vsel %vm634, %v759, 0
  %763 = vmatprep.subr.bf16.mxu0 0
  %764 = vmatpush1.bf16.msra.mxu0 0
  %765 = vmatprep.subr.bf16.mxu0 0
  %766 = vmatpush1.bf16.msra.mxu0 0
  %767 = vmatprep.subr.bf16.mxu0 0
  %768 = vmatpush1.bf16.msra.mxu0 0
  %769 = vmatprep.subr.bf16.mxu0 0
  %770 = vmatpush1.bf16.msra.mxu0 %v627
  %771 = vmatprep.subr.bf16.mxu0 0
  %772 = vmatpush1.bf16.msra.mxu0 %v626
  %773 = vmatprep.subr.bf16.mxu0 0
  %774 = vmatpush1.bf16.msra.mxu0 %v625
  %775 = vmatprep.subr.bf16.mxu0 0
  %776 = vmatpush1.bf16.msra.mxu0 %v624
  %777 = vmatprep.subr.bf16.mxu0 0
  %778 = vmatpush1.bf16.msra.mxu0 %v623
  %779 = vmatprep.subr.bf16.mxu0 0
  %780 = vmatpush2.bf16.msra.mxu0 0
  %781 = vmatprep.subr.bf16.mxu0 0
  %782 = vmatpush2.bf16.msra.mxu0 0
  %783 = vmatprep.subr.bf16.mxu0 0
  %784 = vmatpush2.bf16.msra.mxu0 0
  %785 = vmatprep.subr.bf16.mxu0 0
  %786 = vmatpush2.bf16.msra.mxu0 0
  %787 = vmatprep.subr.bf16.mxu0 0
  %788 = vmatpush2.bf16.msra.mxu0 0
  %789 = vmatprep.subr.bf16.mxu0 0
  %790 = vmatpush2.bf16.msra.mxu0 0
  %791 = vmatprep.subr.bf16.mxu0 0
  %792 = vmatpush2.bf16.msra.mxu0 0
  %793 = vmatprep.subr.bf16.mxu0 0
  %794 = vmatpush2.bf16.msra.mxu0 0
  %795 = vmatprep.mubr.bf16.mxu0 0
  %796 = vmatmul.mubr.bf16.gmra.mxu0 %v761
  %v797 = vpop.f32.mrf.mxu0
  %v798 = vadd.f32 %v632, %v797
  %v799 = vpop.f32.mrf.mxu0
  %v800 = vpop.f32.mrf.mxu0
  %v801 = vadd.f32 %v632, %v800
  %v802 = vpop.f32.mrf.mxu0
  %803 = vdwg.mxu0
  %804 = vst.msk [vmem:[#allocation5 + $0x10] sm:$0xff] %vm254, %v798
  %805 = vst.msk [vmem:[#allocation5 + $0x18] sm:$0xff] %vm254, %v801
  %v806 = vld [vmem:[#allocation5] sm:$0xff]
  %v807 = vld [vmem:[#allocation5 + $0x8] sm:$0xff]
  %v808 = vld [vmem:[#allocation5 + $0x10] sm:$0xff]
  %v809 = vld [vmem:[#allocation5 + $0x18] sm:$0xff]
  %v810 = vsel %vm254, %v806, 0.0
  %v811 = vsel %vm254, %v807, 0.0
  %v812 = vadd.f32 %v810, %v811
  %v813 = vsel %vm254, %v808, 0.0
  %v814 = vadd.f32 %v812, %v813
  %v815 = vsel %vm254, %v809, 0.0
  %v816 = vadd.f32 %v814, %v815
  %v817 = vrot.slane %v816, 4
  %v818 = vadd.f32 %v816, %v817
  %v819 = vrot.slane %v818, 2
  %v820 = vadd.f32 %v818, %v819
  %v821 = vrot.slane %v820, 1
  %v822 = vadd.f32 %v820, %v821
  %v823 = vrcp.pop 32.0
  %v824 = vmul.f32 %v822, %v823
  %v825 = vsub.f32 %v806, %v824
  %v826 = vsub.f32 %v807, %v824
  %v827 = vsub.f32 %v808, %v824
  %v828 = vsub.f32 %v809, %v824
  %v829 = vmul.f32 %v825, %v825
  %v830 = vmul.f32 %v826, %v826
  %v831 = vmul.f32 %v827, %v827
  %v832 = vmul.f32 %v828, %v828
  %v833 = vsel %vm254, %v829, 0.0
  %v834 = vsel %vm254, %v830, 0.0
  %v835 = vadd.f32 %v833, %v834
  %v836 = vsel %vm254, %v831, 0.0
  %v837 = vadd.f32 %v835, %v836
  %v838 = vsel %vm254, %v832, 0.0
  %v839 = vadd.f32 %v837, %v838
  %v840 = vrot.slane %v839, 4
  %v841 = vadd.f32 %v839, %v840
  %v842 = vrot.slane %v841, 2
  %v843 = vadd.f32 %v841, %v842
  %v844 = vrot.slane %v843, 1
  %v845 = vadd.f32 %v843, %v844
  %v846 = vmul.f32 %v845, %v823
  %v847 = vld [vmem:[%s8] sm:$0x1]
  %v848 = vadd.f32 %v846, 1e-05
  %v849 = vrsqrt.pop %v848
  %v850 = vmul.f32 %v847, %v849
  %v851 = vld [vmem:[%s9] sm:$0x1]
  %v852 = vmul.f32 %v824, %v850
  %v853 = vsub.f32 %v851, %v852
  %v854 = vld [vmem:[%s10] sm:$0xf]
  %v855 = vld [vmem:[%s11] sm:$0x1]
  %v856 = vld [vmem:[%s12] sm:$0xff]
  %v857 = vld [vmem:[%s12 + $0x8] sm:$0xff]
  %v858 = vld [vmem:[%s12 + $0x10] sm:$0xff]
  %v859 = vld [vmem:[%s12 + $0x18] sm:$0xff]
  %v860 = vld [vmem:[%s13] sm:$0x1]
  %v861 = vld [vmem:[#allocation5] ss:$2 sm:$0xff]
  %s862 = scalar_lea.vmem [#allocation5], 1
  %v863 = vld [vmem:[%s862] ss:$2 sm:$0xff]
  %v865 = vlaneseq
  %v866 = vshrl.u32 %v865, 7
  %v867 = vsub.s32 0, %v866
  %v868 = vrot.slane %v850, %v867
  %v870 = vmul.f32 %v861, %v868
  %v872 = vlaneseq
  %v873 = vshrl.u32 %v872, 7
  %v874 = vsub.s32 0, %v873
  %v875 = vrot.slane %v853, %v874
  %v877 = vadd.f32 %v870, %v875
  %v878 = vmax.f32 %v877, 0.0
  %v879 = vmul.f32 %v863, %v868
  %v880 = vadd.f32 %v879, %v875
  %v881 = vmax.f32 %v880, 0.0
  %v882 = vmax.f32 %v878, %v881
  %v883 = vld [vmem:[%s1] sm:$0xff]
  %v884 = vpack.c.bf16 %v883, %v883
  %v885 = vpack.c.bf16 %v854, %v854
  %v887 = vlaneseq
  %v888 = vshrl.u32 %v887, 7
  %v889 = vsub.s32 0, %v888
  %v890 = vrot.slane %v855, %v889
  %v893 = vsel %vm50, %v884, 0
  %v896 = vsel %vm201, %v885, 0
  %898 = vmatprep.subr.bf16.mxu0 0
  %899 = vmatpush1.bf16.msra.mxu0 0
  %900 = vmatprep.subr.bf16.mxu0 0
  %901 = vmatpush1.bf16.msra.mxu0 0
  %902 = vmatprep.subr.bf16.mxu0 0
  %903 = vmatpush1.bf16.msra.mxu0 0
  %904 = vmatprep.subr.bf16.mxu0 0
  %905 = vmatpush1.bf16.msra.mxu0 0
  %906 = vmatprep.subr.bf16.mxu0 0
  %907 = vmatpush1.bf16.msra.mxu0 0
  %908 = vmatprep.subr.bf16.mxu0 0
  %909 = vmatpush1.bf16.msra.mxu0 0
  %910 = vmatprep.subr.bf16.mxu0 0
  %911 = vmatpush1.bf16.msra.mxu0 0
  %912 = vmatprep.subr.bf16.mxu0 0
  %913 = vmatpush1.bf16.msra.mxu0 %v896
  %914 = vmatprep.subr.bf16.mxu0 0
  %915 = vmatpush2.bf16.msra.mxu0 0
  %916 = vmatprep.subr.bf16.mxu0 0
  %917 = vmatpush2.bf16.msra.mxu0 0
  %918 = vmatprep.subr.bf16.mxu0 0
  %919 = vmatpush2.bf16.msra.mxu0 0
  %920 = vmatprep.subr.bf16.mxu0 0
  %921 = vmatpush2.bf16.msra.mxu0 0
  %922 = vmatprep.subr.bf16.mxu0 0
  %923 = vmatpush2.bf16.msra.mxu0 0
  %924 = vmatprep.subr.bf16.mxu0 0
  %925 = vmatpush2.bf16.msra.mxu0 0
  %926 = vmatprep.subr.bf16.mxu0 0
  %927 = vmatpush2.bf16.msra.mxu0 0
  %928 = vmatprep.subr.bf16.mxu0 0
  %929 = vmatpush2.bf16.msra.mxu0 0
  %930 = vmatprep.mubr.bf16.mxu0 0
  %931 = vmatmul.mubr.bf16.gmra.mxu0 %v893
  %v932 = vpop.f32.mrf.mxu0
  %v933 = vadd.f32 %v890, %v932
  %v934 = vpop.f32.mrf.mxu0
  %v935 = vpop.f32.mrf.mxu0
  %v936 = vpop.f32.mrf.mxu0
  %937 = vdwg.mxu0
  %938 = vst.msk [vmem:[%s14] sm:$0xff] %vm254, %v933
  %940 = vrot.lane.b32.xlu0 %v882, 16
  %v941 = vpop.permute.xlu0 %940
  %943 = vst.msk [vmem:[%s14] sm:$0xff] %vm578, %v941
  %v944 = vld [vmem:[%s14] sm:$0xff]
  %v945 = vpack.c.bf16 %v944, %v944
  %v946 = vpack.c.bf16 %v857, %v856
  %v947 = vpack.c.bf16 %v859, %v858
  %v949 = vlaneseq
  %v950 = vshrl.u32 %v949, 7
  %v951 = vsub.s32 0, %v950
  %v952 = vrot.slane %v860, %v951
  %vm954 = vcmask 261120
  %v956 = vsel %vm954, %v945, 0
  %958 = vmatprep.subr.bf16.mxu0 0
  %959 = vmatpush1.bf16.msra.mxu0 0
  %960 = vmatprep.subr.bf16.mxu0 0
  %961 = vmatpush1.bf16.msra.mxu0 0
  %962 = vmatprep.subr.bf16.mxu0 0
  %963 = vmatpush1.bf16.msra.mxu0 0
  %964 = vmatprep.subr.bf16.mxu0 0
  %965 = vmatpush1.bf16.msra.mxu0 0
  %966 = vmatprep.subr.bf16.mxu0 0
  %967 = vmatpush1.bf16.msra.mxu0 0
  %968 = vmatprep.subr.bf16.mxu0 0
  %969 = vmatpush1.bf16.msra.mxu0 0
  %970 = vmatprep.subr.bf16.mxu0 0
  %971 = vmatpush1.bf16.msra.mxu0 %v947
  %972 = vmatprep.subr.bf16.mxu0 0
  %973 = vmatpush1.bf16.msra.mxu0 %v946
  %974 = vmatprep.subr.bf16.mxu0 0
  %975 = vmatpush2.bf16.msra.mxu0 0
  %976 = vmatprep.subr.bf16.mxu0 0
  %977 = vmatpush2.bf16.msra.mxu0 0
  %978 = vmatprep.subr.bf16.mxu0 0
  %979 = vmatpush2.bf16.msra.mxu0 0
  %980 = vmatprep.subr.bf16.mxu0 0
  %981 = vmatpush2.bf16.msra.mxu0 0
  %982 = vmatprep.subr.bf16.mxu0 0
  %983 = vmatpush2.bf16.msra.mxu0 0
  %984 = vmatprep.subr.bf16.mxu0 0
  %985 = vmatpush2.bf16.msra.mxu0 0
  %986 = vmatprep.subr.bf16.mxu0 0
  %987 = vmatpush2.bf16.msra.mxu0 0
  %988 = vmatprep.subr.bf16.mxu0 0
  %989 = vmatpush2.bf16.msra.mxu0 0
  %990 = vmatprep.mubr.bf16.mxu0 0
  %991 = vmatmul.mubr.bf16.gmra.mxu0 %v956
  %v992 = vpop.f32.mrf.mxu0
  %v993 = vadd.f32 %v952, %v992
  %v994 = vpop.f32.mrf.mxu0
  %v995 = vpop.f32.mrf.mxu0
  %v996 = vpop.f32.mrf.mxu0
  %997 = vdwg.mxu0
  %vm998 = vcmask 195584
  %999 = vst.msk [vmem:[%s15] sm:$0xff] %vm998, %v993
  %s1000 = scalar_lea.vmem [#allocation5], 16
  %v1001 = vld [vmem:[%s1000] ss:$2 sm:$0xff]
  %s1002 = scalar_lea.vmem [#allocation5], 17
  %v1003 = vld [vmem:[%s1002] ss:$2 sm:$0xff]
  %v1004 = vmul.f32 %v1001, %v868
  %v1005 = vadd.f32 %v1004, %v875
  %v1006 = vmax.f32 %v1005, 0.0
  %v1007 = vmul.f32 %v1003, %v868
  %v1008 = vadd.f32 %v1007, %v875
  %v1009 = vmax.f32 %v1008, 0.0
  %v1010 = vmax.f32 %v1006, %v1009
  %s1011 = scalar_lea.vmem %s1, 8
  %v1012 = vld [vmem:[%s1011] sm:$0xff]
  %v1013 = vpack.c.bf16 %v1012, %v1012
  %v1015 = vsel %vm50, %v1013, 0
  %1017 = vmatprep.subr.bf16.mxu0 0
  %1018 = vmatpush1.bf16.msra.mxu0 0
  %1019 = vmatprep.subr.bf16.mxu0 0
  %1020 = vmatpush1.bf16.msra.mxu0 0
  %1021 = vmatprep.subr.bf16.mxu0 0
  %1022 = vmatpush1.bf16.msra.mxu0 0
  %1023 = vmatprep.subr.bf16.mxu0 0
  %1024 = vmatpush1.bf16.msra.mxu0 0
  %1025 = vmatprep.subr.bf16.mxu0 0
  %1026 = vmatpush1.bf16.msra.mxu0 0
  %1027 = vmatprep.subr.bf16.mxu0 0
  %1028 = vmatpush1.bf16.msra.mxu0 0
  %1029 = vmatprep.subr.bf16.mxu0 0
  %1030 = vmatpush1.bf16.msra.mxu0 0
  %1031 = vmatprep.subr.bf16.mxu0 0
  %1032 = vmatpush1.bf16.msra.mxu0 %v896
  %1033 = vmatprep.subr.bf16.mxu0 0
  %1034 = vmatpush2.bf16.msra.mxu0 0
  %1035 = vmatprep.subr.bf16.mxu0 0
  %1036 = vmatpush2.bf16.msra.mxu0 0
  %1037 = vmatprep.subr.bf16.mxu0 0
  %1038 = vmatpush2.bf16.msra.mxu0 0
  %1039 = vmatprep.subr.bf16.mxu0 0
  %1040 = vmatpush2.bf16.msra.mxu0 0
  %1041 = vmatprep.subr.bf16.mxu0 0
  %1042 = vmatpush2.bf16.msra.mxu0 0
  %1043 = vmatprep.subr.bf16.mxu0 0
  %1044 = vmatpush2.bf16.msra.mxu0 0
  %1045 = vmatprep.subr.bf16.mxu0 0
  %1046 = vmatpush2.bf16.msra.mxu0 0
  %1047 = vmatprep.subr.bf16.mxu0 0
  %1048 = vmatpush2.bf16.msra.mxu0 0
  %1049 = vmatprep.mubr.bf16.mxu0 0
  %1050 = vmatmul.mubr.bf16.gmra.mxu0 %v1015
  %v1051 = vpop.f32.mrf.mxu0
  %v1052 = vadd.f32 %v890, %v1051
  %v1053 = vpop.f32.mrf.mxu0
  %v1054 = vpop.f32.mrf.mxu0
  %v1055 = vpop.f32.mrf.mxu0
  %1056 = vdwg.mxu0
  %1058 = vrot.lane.b32.xlu0 %v1052, 32
  %v1059 = vpop.permute.xlu0 %1058
  %1061 = vst.msk [vmem:[%s14] sm:$0xff] %vm591, %v1059
  %1063 = vrot.lane.b32.xlu0 %v1010, 48
  %v1064 = vpop.permute.xlu0 %1063
  %1066 = vst.msk [vmem:[%s14] sm:$0xff] %vm604, %v1064
  %v1067 = vld [vmem:[%s14] sm:$0xff]
  %v1068 = vpack.c.bf16 %v1067, %v1067
  %1070 = vrot.lane.b32.xlu0 %v1068, 96
  %v1071 = vpop.permute.xlu0 %1070
  %v1073 = vsel %vm954, %v1071, 0
  %1075 = vmatprep.subr.bf16.mxu0 0
  %1076 = vmatpush1.bf16.msra.mxu0 0
  %1077 = vmatprep.subr.bf16.mxu0 0
  %1078 = vmatpush1.bf16.msra.mxu0 0
  %1079 = vmatprep.subr.bf16.mxu0 0
  %1080 = vmatpush1.bf16.msra.mxu0 0
  %1081 = vmatprep.subr.bf16.mxu0 0
  %1082 = vmatpush1.bf16.msra.mxu0 0
  %1083 = vmatprep.subr.bf16.mxu0 0
  %1084 = vmatpush1.bf16.msra.mxu0 0
  %1085 = vmatprep.subr.bf16.mxu0 0
  %1086 = vmatpush1.bf16.msra.mxu0 0
  %1087 = vmatprep.subr.bf16.mxu0 0
  %1088 = vmatpush1.bf16.msra.mxu0 %v947
  %1089 = vmatprep.subr.bf16.mxu0 0
  %1090 = vmatpush1.bf16.msra.mxu0 %v946
  %1091 = vmatprep.subr.bf16.mxu0 0
  %1092 = vmatpush2.bf16.msra.mxu0 0
  %1093 = vmatprep.subr.bf16.mxu0 0
  %1094 = vmatpush2.bf16.msra.mxu0 0
  %1095 = vmatprep.subr.bf16.mxu0 0
  %1096 = vmatpush2.bf16.msra.mxu0 0
  %1097 = vmatprep.subr.bf16.mxu0 0
  %1098 = vmatpush2.bf16.msra.mxu0 0
  %1099 = vmatprep.subr.bf16.mxu0 0
  %1100 = vmatpush2.bf16.msra.mxu0 0
  %1101 = vmatprep.subr.bf16.mxu0 0
  %1102 = vmatpush2.bf16.msra.mxu0 0
  %1103 = vmatprep.subr.bf16.mxu0 0
  %1104 = vmatpush2.bf16.msra.mxu0 0
  %1105 = vmatprep.subr.bf16.mxu0 0
  %1106 = vmatpush2.bf16.msra.mxu0 0
  %1107 = vmatprep.mubr.bf16.mxu0 0
  %1108 = vmatmul.mubr.bf16.gmra.mxu0 %v1073
  %v1109 = vpop.f32.mrf.mxu0
  %v1110 = vadd.f32 %v952, %v1109
  %v1111 = vpop.f32.mrf.mxu0
  %v1112 = vpop.f32.mrf.mxu0
  %v1113 = vpop.f32.mrf.mxu0
  %1114 = vdwg.mxu0
  %1116 = vrot.lane.b32.xlu0 %v1110, 24
  %v1117 = vpop.permute.xlu0 %1116
  %vm1119 = vcmask 392384
  %1120 = vst.msk [vmem:[%s15] sm:$0xff] %vm1119, %v1117
  // Predicated region
  $region58: #{fast_conv_forward.1} parent=0 // pred_check
    _
  $region59: #{fast_conv_forward.1} parent=0 // pred_check_branch
    %1122 = sbr.rel (0) target = $region61
  $region60: #{fast_conv_forward.1} parent=0 // pred_region
    _
  $region61: #{fast_conv_forward.1} parent=0 // pred_fallthru
    _
  // Predicated region
  $region62: #{fast_conv_forward.1} parent=0 // pred_check
    _
  $region63: #{fast_conv_forward.1} parent=0 // pred_check_branch
    %1124 = sbr.rel (0) target = $region65
  $region64: #{fast_conv_forward.1} parent=0 // pred_region
    _
  $region65: #{fast_conv_forward.1} parent=0 // pred_fallthru
    _
  // Predicated region
  $region66: #{fast_conv_forward.1} parent=0 // pred_check
    _
  $region67: #{fast_conv_forward.1} parent=0 // pred_check_branch
    %1126 = sbr.rel (0) target = $region69
  $region68: #{fast_conv_forward.1} parent=0 // pred_region
    _
  $region69: #{fast_conv_forward.1} parent=0 // pred_fallthru
    _
  // Predicated region
  $region70: #{fast_conv_forward.1} parent=0 // pred_check
    _
  $region71: #{fast_conv_forward.1} parent=0 // pred_check_branch
    %1128 = sbr.rel (0) target = $region73
  $region72: #{fast_conv_forward.1} parent=0 // pred_region
    _
  $region73: #{fast_conv_forward.1} parent=0 // pred_fallthru
    _

</llo_original>
